<compile_context>
chip_gen: v7x
topology: tpu7x:2x2x1
jax: 0.10.0
libtpu: 0.0.40
codegen_flags: <defaults>
</compile_context>

<pallas_src>
import functools

import jax
import jax.numpy as jnp
from jax.experimental import pallas as pl
from jax.experimental.pallas import tpu as pltpu


_EXPAND_MAT_MAX_BYTES = 4 << 20   # guard for the in-kernel nearest-upsample selector


# ---------------------------------------------------------------------------
# Small helpers
# ---------------------------------------------------------------------------
def _round_up(x, m):
    return ((x + m - 1) // m) * m


def _vmem_budget_bytes():
    """Generation-aware VMEM budget (~3/4 of physical VMEM)."""
    try:
        cap = int(pltpu.get_tpu_info().vmem_capacity_bytes)
    except Exception:                 # query unavailable -> conservative (v7x) value
        cap = 64 << 20
    return (cap * 3) // 4             # ~48 MiB on v7x, ~96 MiB on v5e/v6e


def _resident_spec(shape, index_map, single_buffer):
    """BlockSpec for grid-invariant operands (weight/bias): single-buffered."""
    if single_buffer:
        return pl.BlockSpec(shape, index_map, pipeline_mode=pl.Buffered(1))
    return pl.BlockSpec(shape, index_map)


def _choose_lane_tile(hw, per_lane_bytes, fixed_bytes, budget_bytes):
    """Pick (lane_tile, padded_hw): full H*W if it fits the VMEM budget, otherwise the
    largest 128-multiple tile that divides the 128-padded H*W and fits the budget."""
    avail = max(budget_bytes - fixed_bytes, 1 << 20)
    max_lanes = max(int(avail // max(per_lane_bytes, 1)), 128)
    if hw <= max_lanes:
        return hw, hw                           # one full lane block (always legal)
    hw_pad = _round_up(hw, 128)                 # lane-dense tiles -> unmasked stores
    tl = max((min(max_lanes, hw_pad) // 128) * 128, 128)
    while hw_pad % tl:
        tl -= 128
    return tl, hw_pad


def _nearest_expand_matrix(h, w, H, W, hw_pad, dtype):
    """0/1 selector E (h*w, hw_pad) with nearest_resize(x) == x @ E (floor mapping)."""
    y = jnp.arange(H)[:, None]
    x = jnp.arange(W)[None, :]
    src = ((y * h) // H) * w + (x * w) // W                 # (H, W) source flat index
    src = jnp.pad(src.reshape(-1), (0, hw_pad - H * W))     # pad lanes -> src 0 (discarded)
    return (jnp.arange(h * w)[:, None] == src[None, :]).astype(dtype)


# ---------------------------------------------------------------------------
# Pallas kernel: fused nearest-resize + channel-concat + 1x1 conv
# ---------------------------------------------------------------------------
def _harbor_kernel(*refs, piece_meta, num_low, nb, compute_dtype):
    """One (sample-block, lane-tile) step.

    refs = (x_0..x_{P-1}, E_0..E_{L-1}, weight, bias, out[, cat_scratch])
      x_p  : (nb, C_p, TL)   full-res piece, float32         if piece_meta[p][2] < 0
             (nb, C_p, h*w)  native-res piece, float32       otherwise
      E_l  : (h*w, TL)       0/1 nearest-upsample selector, compute_dtype
      weight : (C_out, C_total) compute_dtype    bias : (C_out, 1) float32
      out  : (nb, C_out, TL)
      cat_scratch : (C_total, TL) float32 VMEM (present only when P > 1)
    """
    num_pieces = len(piece_meta)
    x_refs = refs[:num_pieces]
    e_refs = refs[num_pieces:num_pieces + num_low]
    w_ref = refs[num_pieces + num_low]
    b_ref = refs[num_pieces + num_low + 1]
    o_ref = refs[num_pieces + num_low + 2]
    cat_ref = refs[num_pieces + num_low + 3] if num_pieces > 1 else None

    w = w_ref[...]                                # (C_out, C_total), grid-resident
    bias = b_ref[...]                             # (C_out, 1) f32

    def piece_f32(x_ref, e_slot, n):
        if e_slot >= 0:
            # fused f32->bf16 cast + exact nearest upsample (0/1 selector matmul):
            # only the native-resolution map is DMA'd from HBM.
            xl = x_ref[n].astype(compute_dtype)
            return jnp.dot(xl, e_refs[e_slot][...],
                           preferred_element_type=jnp.float32)
        return x_ref[n]                           # f32; cast once at the final dot

    for n in range(nb):                           # static unroll over samples in block
        if num_pieces == 1:
            xcat = piece_f32(x_refs[0], piece_meta[0][2], n).astype(compute_dtype)
        else:
            # assemble the virtual channel-concat in VMEM (original input order)
            for x_ref, (c_off, c_sz, e_slot) in zip(x_refs, piece_meta):
                cat_ref[pl.ds(c_off, c_sz), :] = piece_f32(x_ref, e_slot, n)
            xcat = cat_ref[...].astype(compute_dtype)
        # ONE MXU matmul over the full K = C_total (internal f32 accumulation)
        acc = jnp.dot(w, xcat, preferred_element_type=jnp.float32) + bias
        o_ref[n] = acc.astype(o_ref.dtype)


def harbor_channel_op_pallas(pieces, weight, bias, *, target_hw,
                             out_dtype=jnp.float32, compute_dtype=jnp.bfloat16,
                             samples_per_block=None):
    """Fused nearest-resize + channel-concat + 1x1 conv.

    pieces : list of (x, native_hw) in original input order.
             x : (N, C_i, L_i) float32 (producer dtype).  native_hw is None when the
             piece is already at target resolution (L_i == H*W), else (h, w) and the
             nearest upsample h*w -> H*W happens inside the kernel.
    weight : (C_out, C_total), C_total = sum_i C_i (concat order == piece order).
    bias   : (C_out,) float32.
    Returns (N, C_out, H*W) in `out_dtype`.
    """
    H, W = target_hw
    HW = H * W
    N = pieces[0][0].shape[0]
    C_out, C_total = weight.shape
    assert C_total == sum(x.shape[1] for x, _ in pieces)

    out_isz = jnp.dtype(out_dtype).itemsize
    cdt_isz = jnp.dtype(compute_dtype).itemsize
    budget = _vmem_budget_bytes()

    # ---- samples per grid step: amortize the ~0.35us/step cost, keep >=2 steps ----
    per_sample_bytes = C_out * HW * out_isz
    for x, _native in pieces:
        per_sample_bytes += x.shape[1] * x.shape[2] * 4
    nb = samples_per_block or 1
    if samples_per_block is None:
        while (nb * 2 <= N and N % (nb * 2) == 0 and N // (nb * 2) >= 2
               and nb * per_sample_bytes < (1 << 20)):
            nb *= 2
    assert N % nb == 0

    # ---- lane tile sized from the generation-aware VMEM budget ----
    per_lane = C_total * 4 + nb * (C_out + C_total) * 4       # cat scratch + live vregs
    per_lane += 2 * nb * C_out * out_isz                      # double-buffered output
    fixed = 2 * C_out * C_total * cdt_isz + 4 * C_out         # weight + bias
    for x, native in pieces:
        c = x.shape[1]
        if native is None:
            per_lane += 2 * nb * c * 4                        # double-buffered f32 input
        else:
            per_lane += 2 * x.shape[2] * cdt_isz              # selector columns
            fixed += 2 * nb * c * x.shape[2] * 4              # whole native map per step
    per_lane = int(per_lane * 1.5)                            # headroom
    TL, HW_pad = _choose_lane_tile(HW, per_lane, fixed, budget)
    vmem_limit = int(min(budget, max(2 * (fixed + per_lane * TL), 8 << 20)))

    # ---- operands + per-piece metadata ----
    xs, es, piece_meta = [], [], []
    c_off = 0
    pad = HW_pad - HW
    for x, native in pieces:
        c = x.shape[1]
        if native is None:
            if pad:
                x = jnp.pad(x, ((0, 0), (0, 0), (0, pad)))
            piece_meta.append((c_off, c, -1))
        else:
            h, w = native
            es.append(_nearest_expand_matrix(h, w, H, W, HW_pad, compute_dtype))
            piece_meta.append((c_off, c, len(es) - 1))
        xs.append(x)
        c_off += c

    w_op = weight.astype(compute_dtype)
    b_op = bias.reshape(C_out, 1).astype(jnp.float32)
    grid = (N // nb, HW_pad // TL)
    lane_blocks = grid[1]

    kernel = functools.partial(_harbor_kernel, piece_meta=tuple(piece_meta),
                               num_low=len(es), nb=nb, compute_dtype=compute_dtype)

    scratch_shapes = []
    if len(pieces) > 1:
        scratch_shapes.append(pltpu.VMEM((C_total, TL), jnp.float32))

    def _run(single_buffer_resident):
        in_specs = []
        for x, (_c_off, c, e_slot) in zip(xs, piece_meta):
            if e_slot < 0:
                in_specs.append(pl.BlockSpec((nb, c, TL), lambda b, j: (b, 0, j)))
            else:
                in_specs.append(
                    pl.BlockSpec((nb, c, x.shape[2]), lambda b, j: (b, 0, 0)))
        for e in es:
            if lane_blocks == 1:
                in_specs.append(_resident_spec((e.shape[0], TL), lambda b, j: (0, 0),
                                               single_buffer_resident))
            else:
                in_specs.append(pl.BlockSpec((e.shape[0], TL), lambda b, j: (0, j)))
        in_specs.append(_resident_spec((C_out, C_total), lambda b, j: (0, 0),
                                       single_buffer_resident))
        in_specs.append(_resident_spec((C_out, 1), lambda b, j: (0, 0),
                                       single_buffer_resident))
        out = pl.pallas_call(
            kernel,
            out_shape=jax.ShapeDtypeStruct((N, C_out, HW_pad), out_dtype),
            grid_spec=pltpu.PrefetchScalarGridSpec(
                num_scalar_prefetch=0,
                grid=grid,
                in_specs=in_specs,
                out_specs=pl.BlockSpec((nb, C_out, TL), lambda b, j: (b, 0, j)),
                scratch_shapes=scratch_shapes,
            ),
            compiler_params=pltpu.CompilerParams(
                dimension_semantics=("parallel", "parallel"),
                vmem_limit_bytes=vmem_limit,
            ),
        )(*xs, *es, w_op, b_op)
        return jax.block_until_ready(out)

    try:
        y = _run(True)
    except Exception:
        # pl.Buffered(1) single-buffering unavailable -> default double buffering
        y = _run(False)

    if pad:
        y = y[..., :HW]
    return y


# ---------------------------------------------------------------------------
# HarborPolicy (JAX) mirroring the PyTorch module's structure
# ---------------------------------------------------------------------------
class HarborPolicyBaseJAX:
    """JAX/Pallas port of pt_tnn HarborPolicyBase with the canonical concrete
    policy: nearest-resize every input to `input_shape`, concatenate channels,
    apply a 1x1 convolution to `out_channels`."""

    def __init__(self, input_shape, in_channels, out_channels,
                 compute_dtype=jnp.bfloat16, out_dtype=jnp.float32):
        assert input_shape is not None
        assert in_channels is not None
        assert out_channels is not None
        assert len(input_shape) == 2 or len(input_shape) == 0, (
            "input_shape should be a tuple of length 2 for the spatial size "
            "of the harbor policy output.")
        self._input_shape = tuple(input_shape)
        self._in_channels = list(in_channels)
        self._out_channels = out_channels
        self._operations_initialized = False
        self._input_shapes = None
        self._compute_dtype = compute_dtype
        self._out_dtype = out_dtype      # bf16 halves output HBM traffic (v5e win)
        self.input_specific_ops = {
            "ff_input": None, "fb_input": None, "skip_input": None}

    # ---- properties mirroring the torch base class ----
    @property
    def input_shapes(self):
        assert self._input_shapes is not None
        return self._input_shapes

    @property
    def out_channels(self):
        return self._out_channels

    @property
    def in_channels(self):
        return self._in_channels

    @property
    def input_shape(self):
        return self._input_shape

    @property
    def operations_initialized(self):
        return self._operations_initialized

    def random_input(self, key=None):
        key = jax.random.PRNGKey(0) if key is None else key
        if len(self._input_shape) == 2:
            return jax.random.uniform(
                key, (10, self._out_channels,
                      self._input_shape[0], self._input_shape[1]))
        return jax.random.uniform(key, (10, self._out_channels))

    # ---- operation init (deterministic synthetic parameters) ----
    def initialize_operations(self, input_shapes, key):
        """input_shapes: list of (C, H, W) tuples, one per input."""
        assert len(input_shapes) == len(self._in_channels)
        # TODO(synk): len(input_shape) == 0 (fully-connected harbor) not implemented.
        assert len(self._input_shape) == 2
        self._input_shapes = list(input_shapes)
        c_total = sum(self._in_channels)
        kw, kb = jax.random.split(key)
        # torch 1x1 conv weight (C_out, C_total, 1, 1) -> (C_out, C_total)
        self.weight_f32 = (
            jax.random.normal(kw, (self._out_channels, c_total), jnp.float32)
            * (1.0 / jnp.sqrt(c_total)))
        self.weight = self.weight_f32.astype(self._compute_dtype)   # cast once, host-side
        self.bias = jax.random.normal(kb, (self._out_channels,), jnp.float32) * 0.01
        self._operations_initialized = True

    # ---- spatial op: nearest-neighbour resize to self.input_shape ----
    def spatial_op(self, inputs, input_types):
        """Inputs smaller than the target are NOT materialized here: they are returned
        at native resolution with their (h, w) so channel_op commutes the nearest
        upsample into the Pallas kernel (no HBM round trip of the upsampled map)."""
        H, W = self._input_shape
        hw_pad = _round_up(H * W, 128)
        pieces = []
        for x in inputs:                       # (N, C, h, w) NCHW
            n, c, h, w = x.shape
            if (h, w) == (H, W):
                pieces.append((x.reshape(n, c, H * W), None))
            elif h * w <= H * W and h * w * hw_pad * 2 <= _EXPAND_MAT_MAX_BYTES:
                pieces.append((x.reshape(n, c, h * w), (h, w)))    # expand in-kernel
            elif h % H == 0 and w % W == 0:
                xd = x[:, :, ::h // H, ::w // W]                   # integer downsample
                pieces.append((xd.reshape(n, c, H * W), None))
            else:
                # TODO(synk): large/irregular resizes fall back to a host-side
                # floor-mapped nearest gather (torch F.interpolate rounding may differ).
                ridx = (jnp.arange(H) * h // H).astype(jnp.int32)
                cidx = (jnp.arange(W) * w // W).astype(jnp.int32)
                xr = x[:, :, ridx, :][:, :, :, cidx]
                pieces.append((xr.reshape(n, c, H * W), None))
        return pieces

    # ---- channel op: virtual concat + 1x1 conv (Pallas hot path) ----
    def channel_op(self, pieces, input_types):
        N = pieces[0][0].shape[0]
        H, W = self._input_shape
        y = harbor_channel_op_pallas(
            pieces, self.weight, self.bias, target_hw=(H, W),
            out_dtype=self._out_dtype, compute_dtype=self._compute_dtype)
        return y.reshape(N, self._out_channels, H, W)

    # ---- forward: exact structural semantics of the torch base class ----
    def forward(self, inputs=None, input_types=None):
        assert self.operations_initialized
        assert isinstance(inputs, list) and isinstance(input_types, list)
        assert len(inputs) == len(input_types)
        assert len([t for t in input_types if t == "ff_input"]) == 1
        outputs = self.spatial_op(inputs, input_types)
        outputs = self.channel_op(outputs, input_types)
        return outputs

    __call__ = forward


# ---------------------------------------------------------------------------
# main
# ---------------------------------------------------------------------------
if __name__ == "__main__":
    key = jax.random.PRNGKey(0)
    k_ff, k_fb, k_params = jax.random.split(key, 3)

    # small shapes: batch=2, ff input 4ch @ 16x16, fb input 8ch @ 8x8
    N = 2
    input_shape = (16, 16)
    in_channels = [4, 8]
    out_channels = 32

    ff = jax.random.normal(k_ff, (N, in_channels[0], 16, 16), jnp.float32)
    fb = jax.random.normal(k_fb, (N, in_channels[1], 8, 8), jnp.float32)

    policy = HarborPolicyBaseJAX(input_shape, in_channels, out_channels,
                                 compute_dtype=jnp.bfloat16, out_dtype=jnp.float32)
    policy.initialize_operations(input_shapes=[(4, 16, 16), (8, 8, 8)], key=k_params)

    out = policy([ff, fb], ["ff_input", "fb_input"])
    out = jax.block_until_ready(out)

    # ---- pure-JAX reference: materialized nearest resize + concat + 1x1 conv ----
    def nearest_resize(x, H, W):
        n, c, h, w = x.shape
        ridx = (jnp.arange(H) * h // H).astype(jnp.int32)
        cidx = (jnp.arange(W) * w // W).astype(jnp.int32)
        return x[:, :, ridx, :][:, :, :, cidx]

    x_cat = jnp.concatenate([nearest_resize(ff, 16, 16),
                             nearest_resize(fb, 16, 16)], axis=1)
    x_cat = x_cat.astype(jnp.bfloat16).astype(jnp.float32)   # kernel's bf16 MXU inputs
    w_ref = policy.weight.astype(jnp.float32)                 # bf16-quantized weights
    ref = jnp.einsum("nchw,oc->nohw", x_cat, w_ref) + policy.bias[None, :, None, None]

    assert out.shape == (N, out_channels, 16, 16)
    err = float(jnp.max(jnp.abs(out.astype(jnp.float32) - ref)))
    assert jnp.allclose(out.astype(jnp.float32), ref, atol=2e-3, rtol=2e-3), err

    print("KERNEL_OK")
</pallas_src>

<mosaic_0001>
module attributes {stable_mosaic.version = 11 : i64} {
  func.func @_harbor_kernel(%arg0: i32, %arg1: i32, %arg2: memref<1x4x256xf32, #tpu.memory_space<vmem>>, %arg3: memref<1x8x64xf32, #tpu.memory_space<vmem>>, %arg4: memref<64x256xbf16, #tpu.memory_space<vmem>>, %arg5: memref<32x12xbf16, #tpu.memory_space<vmem>>, %arg6: memref<32x1xf32, #tpu.memory_space<vmem>>, %arg7: memref<1x32x256xf32, #tpu.memory_space<vmem>>, %arg8: memref<12x256xf32, #tpu.memory_space<vmem>>) attributes {dimension_semantics = [#tpu.dimension_semantics<parallel>, #tpu.dimension_semantics<parallel>], iteration_bounds = array<i64: 2, 1>, scalar_prefetch = 0 : i64, scratch_operands = 1 : i64, tpu.core_type = #tpu.core_type<tc>, window_params = [{transform_indices = @transform_0, window_bounds = array<i64: 1, 4, 256>}, {transform_indices = @transform_1, window_bounds = array<i64: 1, 8, 64>}, {pipeline_mode = #tpu.pipeline_mode<synchronous>, transform_indices = @transform_2, window_bounds = array<i64: 64, 256>}, {pipeline_mode = #tpu.pipeline_mode<synchronous>, transform_indices = @transform_3, window_bounds = array<i64: 32, 12>}, {pipeline_mode = #tpu.pipeline_mode<synchronous>, transform_indices = @transform_4, window_bounds = array<i64: 32, 1>}, {transform_indices = @transform_5, window_bounds = array<i64: 1, 32, 256>}]} {
    %c0 = arith.constant 0 : index
    %c0_0 = arith.constant 0 : index
    %0 = vector.load %arg5[%c0, %c0_0] : memref<32x12xbf16, #tpu.memory_space<vmem>>, vector<32x12xbf16>
    %c0_1 = arith.constant 0 : index
    %c0_2 = arith.constant 0 : index
    %1 = vector.load %arg6[%c0_1, %c0_2] : memref<32x1xf32, #tpu.memory_space<vmem>>, vector<32x1xf32>
    %c0_3 = arith.constant 0 : index
    %c0_4 = arith.constant 0 : index
    %c0_5 = arith.constant 0 : index
    %2 = vector.load %arg2[%c0_3, %c0_4, %c0_5] : memref<1x4x256xf32, #tpu.memory_space<vmem>>, vector<1x4x256xf32>
    %3 = vector.shape_cast %2 : vector<1x4x256xf32> to vector<4x256xf32>
    %c0_6 = arith.constant 0 : index
    %c0_7 = arith.constant 0 : index
    %4 = vector.load %arg8[%c0_6, %c0_7] : memref<12x256xf32, #tpu.memory_space<vmem>>, vector<4x256xf32>
    tpu.vector_store %arg8[%c0_6, %c0_7], %3 {strides = array<i32>} : memref<12x256xf32, #tpu.memory_space<vmem>>, vector<4x256xf32>,
    %c0_8 = arith.constant 0 : index
    %c0_9 = arith.constant 0 : index
    %c0_10 = arith.constant 0 : index
    %5 = vector.load %arg3[%c0_8, %c0_9, %c0_10] : memref<1x8x64xf32, #tpu.memory_space<vmem>>, vector<1x8x64xf32>
    %6 = vector.shape_cast %5 : vector<1x8x64xf32> to vector<8x64xf32>
    %7 = arith.truncf %6 : vector<8x64xf32> to vector<8x64xbf16>
    %c0_11 = arith.constant 0 : index
    %c0_12 = arith.constant 0 : index
    %8 = vector.load %arg4[%c0_11, %c0_12] : memref<64x256xbf16, #tpu.memory_space<vmem>>, vector<64x256xbf16>
    %cst = arith.constant dense<0.000000e+00> : vector<8x256xf32>
    %9 = tpu.matmul %7, %8, %cst {dimension_numbers = #tpu.dot_dimension_numbers<[1], [0], [0], [1], [0, 0, 1, 1], [], []>} : vector<8x64xbf16>, vector<64x256xbf16>, vector<8x256xf32> -> vector<8x256xf32>
    %c4 = arith.constant 4 : index
    %c0_13 = arith.constant 0 : index
    %10 = vector.load %arg8[%c4, %c0_13] : memref<12x256xf32, #tpu.memory_space<vmem>>, vector<8x256xf32>
    tpu.vector_store %arg8[%c4, %c0_13], %9 {strides = array<i32>} : memref<12x256xf32, #tpu.memory_space<vmem>>, vector<8x256xf32>,
    %c0_14 = arith.constant 0 : index
    %c0_15 = arith.constant 0 : index
    %11 = vector.load %arg8[%c0_14, %c0_15] : memref<12x256xf32, #tpu.memory_space<vmem>>, vector<12x256xf32>
    %12 = arith.truncf %11 : vector<12x256xf32> to vector<12x256xbf16>
    %cst_16 = arith.constant dense<0.000000e+00> : vector<32x256xf32>
    %13 = tpu.matmul %0, %12, %cst_16 {dimension_numbers = #tpu.dot_dimension_numbers<[1], [0], [0], [1], [0, 0, 1, 1], [], []>} : vector<32x12xbf16>, vector<12x256xbf16>, vector<32x256xf32> -> vector<32x256xf32>
    %14 = vector.broadcast %1 : vector<32x1xf32> to vector<32x256xf32>
    %15 = arith.addf %13, %14 : vector<32x256xf32>
    %c0_17 = arith.constant 0 : index
    %c0_18 = arith.constant 0 : index
    %c0_19 = arith.constant 0 : index
    %16 = vector.load %arg7[%c0_17, %c0_18, %c0_19] : memref<1x32x256xf32, #tpu.memory_space<vmem>>, vector<1x32x256xf32>
    %17 = vector.shape_cast %16 : vector<1x32x256xf32> to vector<32x256xf32>
    %18 = vector.shape_cast %15 : vector<32x256xf32> to vector<1x32x256xf32>
    tpu.vector_store %arg7[%c0_17, %c0_18, %c0_19], %18 {strides = array<i32>} : memref<1x32x256xf32, #tpu.memory_space<vmem>>, vector<1x32x256xf32>,
    return
  }
  func.func @transform_0(%arg0: i32, %arg1: i32) -> (i32, i32, i32) {
    %c0_i32 = arith.constant 0 : i32
    %c0_i32_0 = arith.constant 0 : i32
    return %arg0, %c0_i32, %arg1 : i32, i32, i32
  }
  func.func @transform_1(%arg0: i32, %arg1: i32) -> (i32, i32, i32) {
    %c0_i32 = arith.constant 0 : i32
    %c0_i32_0 = arith.constant 0 : i32
    %c0_i32_1 = arith.constant 0 : i32
    return %arg0, %c0_i32, %c0_i32_0 : i32, i32, i32
  }
  func.func @transform_2(%arg0: i32, %arg1: i32) -> (i32, i32) {
    %c0_i32 = arith.constant 0 : i32
    %c0_i32_0 = arith.constant 0 : i32
    %c0_i32_1 = arith.constant 0 : i32
    return %c0_i32, %c0_i32_0 : i32, i32
  }
  func.func @transform_3(%arg0: i32, %arg1: i32) -> (i32, i32) {
    %c0_i32 = arith.constant 0 : i32
    %c0_i32_0 = arith.constant 0 : i32
    %c0_i32_1 = arith.constant 0 : i32
    return %c0_i32, %c0_i32_0 : i32, i32
  }
  func.func @transform_4(%arg0: i32, %arg1: i32) -> (i32, i32) {
    %c0_i32 = arith.constant 0 : i32
    %c0_i32_0 = arith.constant 0 : i32
    %c0_i32_1 = arith.constant 0 : i32
    return %c0_i32, %c0_i32_0 : i32, i32
  }
  func.func @transform_5(%arg0: i32, %arg1: i32) -> (i32, i32, i32) {
    %c0_i32 = arith.constant 0 : i32
    %c0_i32_0 = arith.constant 0 : i32
    return %arg0, %c0_i32, %arg1 : i32, i32, i32
  }
}

module attributes {stable_mosaic.version = 11 : i64} {
  func.func @_harbor_kernel(%arg0: i32, %arg1: i32, %arg2: memref<1x4x256xf32, #tpu.memory_space<vmem>>, %arg3: memref<1x8x64xf32, #tpu.memory_space<vmem>>, %arg4: memref<64x256xbf16, #tpu.memory_space<vmem>>, %arg5: memref<32x12xbf16, #tpu.memory_space<vmem>>, %arg6: memref<32x1xf32, #tpu.memory_space<vmem>>, %arg7: memref<1x32x256xf32, #tpu.memory_space<vmem>>, %arg8: memref<12x256xf32, #tpu.memory_space<vmem>>) attributes {dimension_semantics = [#tpu.dimension_semantics<parallel>, #tpu.dimension_semantics<parallel>], iteration_bounds = array<i64: 2, 1>, scalar_prefetch = 0 : i64, scratch_operands = 1 : i64, tpu.core_type = #tpu.core_type<tc>, window_params = [{transform_indices = @transform_0, window_bounds = array<i64: 1, 4, 256>}, {transform_indices = @transform_1, window_bounds = array<i64: 1, 8, 64>}, {pipeline_mode = #tpu.pipeline_mode<synchronous>, transform_indices = @transform_2, window_bounds = array<i64: 64, 256>}, {pipeline_mode = #tpu.pipeline_mode<synchronous>, transform_indices = @transform_3, window_bounds = array<i64: 32, 12>}, {pipeline_mode = #tpu.pipeline_mode<synchronous>, transform_indices = @transform_4, window_bounds = array<i64: 32, 1>}, {transform_indices = @transform_5, window_bounds = array<i64: 1, 32, 256>}]} {
    %c0 = arith.constant 0 : index
    %c0_0 = arith.constant 0 : index
    %0 = vector.load %arg5[%c0, %c0_0] : memref<32x12xbf16, #tpu.memory_space<vmem>>, vector<32x12xbf16>
    %c0_1 = arith.constant 0 : index
    %c0_2 = arith.constant 0 : index
    %1 = vector.load %arg6[%c0_1, %c0_2] : memref<32x1xf32, #tpu.memory_space<vmem>>, vector<32x1xf32>
    %c0_3 = arith.constant 0 : index
    %c0_4 = arith.constant 0 : index
    %c0_5 = arith.constant 0 : index
    %2 = vector.load %arg2[%c0_3, %c0_4, %c0_5] : memref<1x4x256xf32, #tpu.memory_space<vmem>>, vector<1x4x256xf32>
    %3 = vector.shape_cast %2 : vector<1x4x256xf32> to vector<4x256xf32>
    %c0_6 = arith.constant 0 : index
    %c0_7 = arith.constant 0 : index
    %4 = vector.load %arg8[%c0_6, %c0_7] : memref<12x256xf32, #tpu.memory_space<vmem>>, vector<4x256xf32>
    tpu.vector_store %arg8[%c0_6, %c0_7], %3 {strides = array<i32>} : memref<12x256xf32, #tpu.memory_space<vmem>>, vector<4x256xf32>,
    %c0_8 = arith.constant 0 : index
    %c0_9 = arith.constant 0 : index
    %c0_10 = arith.constant 0 : index
    %5 = vector.load %arg3[%c0_8, %c0_9, %c0_10] : memref<1x8x64xf32, #tpu.memory_space<vmem>>, vector<1x8x64xf32>
    %6 = vector.shape_cast %5 : vector<1x8x64xf32> to vector<8x64xf32>
    %7 = arith.truncf %6 : vector<8x64xf32> to vector<8x64xbf16>
    %c0_11 = arith.constant 0 : index
    %c0_12 = arith.constant 0 : index
    %8 = vector.load %arg4[%c0_11, %c0_12] : memref<64x256xbf16, #tpu.memory_space<vmem>>, vector<64x256xbf16>
    %cst = arith.constant dense<0.000000e+00> : vector<8x256xf32>
    %9 = tpu.matmul %7, %8, %cst {dimension_numbers = #tpu.dot_dimension_numbers<[1], [0], [0], [1], [0, 0, 1, 1], [], []>} : vector<8x64xbf16>, vector<64x256xbf16>, vector<8x256xf32> -> vector<8x256xf32>
    %c4 = arith.constant 4 : index
    %c0_13 = arith.constant 0 : index
    %10 = vector.load %arg8[%c4, %c0_13] : memref<12x256xf32, #tpu.memory_space<vmem>>, vector<8x256xf32>
    tpu.vector_store %arg8[%c4, %c0_13], %9 {strides = array<i32>} : memref<12x256xf32, #tpu.memory_space<vmem>>, vector<8x256xf32>,
    %c0_14 = arith.constant 0 : index
    %c0_15 = arith.constant 0 : index
    %11 = vector.load %arg8[%c0_14, %c0_15] : memref<12x256xf32, #tpu.memory_space<vmem>>, vector<12x256xf32>
    %12 = arith.truncf %11 : vector<12x256xf32> to vector<12x256xbf16>
    %cst_16 = arith.constant dense<0.000000e+00> : vector<32x256xf32>
    %13 = tpu.matmul %0, %12, %cst_16 {dimension_numbers = #tpu.dot_dimension_numbers<[1], [0], [0], [1], [0, 0, 1, 1], [], []>} : vector<32x12xbf16>, vector<12x256xbf16>, vector<32x256xf32> -> vector<32x256xf32>
    %14 = vector.broadcast %1 : vector<32x1xf32> to vector<32x256xf32>
    %15 = arith.addf %13, %14 : vector<32x256xf32>
    %c0_17 = arith.constant 0 : index
    %c0_18 = arith.constant 0 : index
    %c0_19 = arith.constant 0 : index
    %16 = vector.load %arg7[%c0_17, %c0_18, %c0_19] : memref<1x32x256xf32, #tpu.memory_space<vmem>>, vector<1x32x256xf32>
    %17 = vector.shape_cast %16 : vector<1x32x256xf32> to vector<32x256xf32>
    %18 = vector.shape_cast %15 : vector<32x256xf32> to vector<1x32x256xf32>
    tpu.vector_store %arg7[%c0_17, %c0_18, %c0_19], %18 {strides = array<i32>} : memref<1x32x256xf32, #tpu.memory_space<vmem>>, vector<1x32x256xf32>,
    return
  }
  func.func @transform_0(%arg0: i32, %arg1: i32) -> (i32, i32, i32) {
    %c0_i32 = arith.constant 0 : i32
    %c0_i32_0 = arith.constant 0 : i32
    return %arg0, %c0_i32, %arg1 : i32, i32, i32
  }
  func.func @transform_1(%arg0: i32, %arg1: i32) -> (i32, i32, i32) {
    %c0_i32 = arith.constant 0 : i32
    %c0_i32_0 = arith.constant 0 : i32
    %c0_i32_1 = arith.constant 0 : i32
    return %arg0, %c0_i32, %c0_i32_0 : i32, i32, i32
  }
  func.func @transform_2(%arg0: i32, %arg1: i32) -> (i32, i32) {
    %c0_i32 = arith.constant 0 : i32
    %c0_i32_0 = arith.constant 0 : i32
    %c0_i32_1 = arith.constant 0 : i32
    return %c0_i32, %c0_i32_0 : i32, i32
  }
  func.func @transform_3(%arg0: i32, %arg1: i32) -> (i32, i32) {
    %c0_i32 = arith.constant 0 : i32
    %c0_i32_0 = arith.constant 0 : i32
    %c0_i32_1 = arith.constant 0 : i32
    return %c0_i32, %c0_i32_0 : i32, i32
  }
  func.func @transform_4(%arg0: i32, %arg1: i32) -> (i32, i32) {
    %c0_i32 = arith.constant 0 : i32
    %c0_i32_0 = arith.constant 0 : i32
    %c0_i32_1 = arith.constant 0 : i32
    return %c0_i32, %c0_i32_0 : i32, i32
  }
  func.func @transform_5(%arg0: i32, %arg1: i32) -> (i32, i32, i32) {
    %c0_i32 = arith.constant 0 : i32
    %c0_i32_0 = arith.constant 0 : i32
    return %arg0, %c0_i32, %arg1 : i32, i32, i32
  }
}

</mosaic_0001>

<llo_original>
// kernel: tpu_custom_call.1
$region0: #{tpu_custom_call.1}
  #allocation0 [shape = 'u32[]', space=smem, size = 0x4, offset = 0x4, fixed_abs, tag = 'smem constant byte address 0x4 - core index']
  #allocation1 [shape = 'u32[144,128]{1,0:T(1,128)}', space=vmem, size = 0x12000, scoped, tag = 'internal scratch']
  #allocation2 [shape = 'f32[12,256]{1,0:T(8,128)}', space=vmem, size = 0x4000, scoped, tag = 'scratch operand']
  %s0 = inlined_call_operand.hbm [shape: f32[2,4,256], index: 0, kind: input, shape index: {}]
  %s1 = inlined_call_operand.hbm [shape: f32[2,8,64], index: 1, kind: input, shape index: {}]
  %s2 = inlined_call_operand.vmem [shape: bf16[64,256], index: 2, kind: input, shape index: {}]
  %s3 = inlined_call_operand.vmem [shape: bf16[32,12], index: 3, kind: input, shape index: {}]
  %s4 = inlined_call_operand.vmem [shape: f32[32,1], index: 4, kind: input, shape index: {}]
  %s5 = inlined_call_operand.hbm [shape: f32[2,32,256], index: 5, kind: output, shape index: {}]
  %s6 = sld [smem:[#allocation0]]
  $region61: #{tpu_custom_call.1} parent=0
    _
  %s8 = ssub.s32 1, %s6
  %s9 = scalar_select 0, %s8, %s6
  $region1: #{tpu_custom_call.1} parent=0
    #allocation3 [shape = 'u8[8192]{0}', space=vmem, size = 0x2000, scoped, tag = 'input window, operand 0']
    #allocation4 [shape = 's32[2]{0}', space=sflag, size = 0x8, scoped, tag = 'scoped memory for tpu_custom_call.1']
    #allocation5 [shape = 's32[2]{0}', space=sflag, size = 0x8, scoped, tag = 'scoped memory for tpu_custom_call.1']
    #allocation6 [shape = 'u8[8192]{0}', space=vmem, size = 0x2000, scoped, tag = 'input window, operand 1']
    #allocation7 [shape = 's32[2]{0}', space=sflag, size = 0x8, scoped, tag = 'scoped memory for tpu_custom_call.1']
    #allocation8 [shape = 'u8[65536]{0}', space=vmem, size = 0x10000, scoped, tag = 'output window, operand 0']
    %10 = vsyncpa [#allocation4], 0
    %s11 = scalar_lea.sflag [#allocation4], 1
    %12 = vsyncpa %s11, 0
    %13 = vsyncpa [#allocation7], 0
    %s14 = scalar_lea.sflag [#allocation7], 1
    %15 = vsyncpa %s14, 0
    %16 = vsyncpa [#allocation5], 0
    %s17 = scalar_lea.sflag [#allocation5], 1
    %18 = vsyncpa %s17, 0
    loop: start=0, step=1, limit=4
    $region2: #{tpu_custom_call.1} parent=1 // loop_pre_header
      _
    $region3: #{tpu_custom_call.1} parent=1 // loop_header
      %s20 = sphi 0, %s24
      %p21 = scmp.ge.s32.totalorder %s20, 4
      %s27 = sphi 0, %s39
      %s28 = sphi 0, %s35
      %s29 = sphi 0, %s27
      %s30 = sphi 0, %s28
      %s31 = sphi 0, %s29
      %s32 = sphi 0, %s30
      %s44 = sphi 0, %s46
      %s47 = sphi 0, %s44
      %s48 = sphi 0, %s47
      %s64 = sphi 0, %s48
      %s70 = sphi 0, %s72
      %s73 = sphi 0, %s70
      %s74 = sphi 0, %s73
      %s90 = sphi 0, %s74
      %s94 = sphi 0, %s94
      %s96 = sphi 0, %s94
      %s97 = sphi 0, %s96
      %s111 = sphi 0, %s97
      %s115 = sphi 0, %s115
      %s117 = sphi 0, %s115
      %s118 = sphi 0, %s117
      %s132 = sphi 0, %s118
      %s136 = sphi 0, %s136
      %s138 = sphi 0, %s136
      %s139 = sphi 0, %s138
      %s153 = sphi 0, %s139
      %s161 = sphi 0, %s163
      %s164 = sphi 0, %s161
      %s165 = sphi 0, %s164
      %s181 = sphi 0, %s165
    $region4: #{tpu_custom_call.1} parent=1 // loop_header_branch
      %23 = sbr.rel (%p21) target = $region8
    $region5: #{tpu_custom_call.1} parent=1 // loop_body
      %s25 = ssub.s32 %s20, 1
      %s26 = ssub.s32 %s20, 2
      %s33 = sadd.s32 1, %s28
      %p34 = scmp.ge.s32.totalorder %s33, 1
      %s35 = scalar_select %p34, 0, %s33
      %s36 = sadd.s32 1, %s27
      %s37 = scalar_select %p34, %s36, %s27
      %p38 = scmp.ge.s32.totalorder %s37, 2
      %s39 = scalar_select %p38, 0, %s37
      %s40 = ssub.s32 %s27, %s39
      %s41 = ssub.s32 %s28, %s35
      %s42 = sor.u32 %s40, %s41
      %p43 = scmp.eq.s32.totalorder %s42, 0
      %s45 = sadd.s32 %s44, 1
      %s46 = scalar_select %p43, %s44, %s45
      %p49 = pneg %p43
      %p50 = scmp.eq.s32.totalorder %s20, 1
      %p51 = por %p49, %p50
      %p52 = scmp.ne.s32.totalorder %s44, %s47
      %p53 = scmp.eq.s32.totalorder %s20, 0
      %p54 = por %p52, %p53
      %p55 = scmp.ne.s32.totalorder %s44, %s47
      %p56 = scmp.eq.s32.totalorder %s25, 1
      %p57 = por %p55, %p56
      %p58 = scmp.ne.s32.totalorder %s47, %s48
      %p59 = scmp.eq.s32.totalorder %s25, 0
      %p60 = por %p58, %p59
      %p61 = scmp.ne.s32.totalorder %s47, %s48
      %p62 = scmp.eq.s32.totalorder %s26, 1
      %p63 = por %p61, %p62
      %p65 = scmp.ne.s32.totalorder %s48, %s64
      %p66 = scmp.eq.s32.totalorder %s26, 0
      %p67 = por %p65, %p66
      %s68 = ssub.s32 %s27, %s39
      %p69 = scmp.eq.s32.totalorder %s68, 0
      %s71 = sadd.s32 %s70, 1
      %s72 = scalar_select %p69, %s70, %s71
      %p75 = pneg %p69
      %p76 = scmp.eq.s32.totalorder %s20, 1
      %p77 = por %p75, %p76
      %p78 = scmp.ne.s32.totalorder %s70, %s73
      %p79 = scmp.eq.s32.totalorder %s20, 0
      %p80 = por %p78, %p79
      %p81 = scmp.ne.s32.totalorder %s70, %s73
      %p82 = scmp.eq.s32.totalorder %s25, 1
      %p83 = por %p81, %p82
      %p84 = scmp.ne.s32.totalorder %s73, %s74
      %p85 = scmp.eq.s32.totalorder %s25, 0
      %p86 = por %p84, %p85
      %p87 = scmp.ne.s32.totalorder %s73, %s74
      %p88 = scmp.eq.s32.totalorder %s26, 1
      %p89 = por %p87, %p88
      %p91 = scmp.ne.s32.totalorder %s74, %s90
      %p92 = scmp.eq.s32.totalorder %s26, 0
      %p93 = por %p91, %p92
      %s95 = sadd.s32 %s94, 1
      %p98 = scmp.eq.s32.totalorder %s20, 1
      %p99 = scmp.ne.s32.totalorder %s94, %s96
      %p100 = scmp.eq.s32.totalorder %s20, 0
      %p101 = por %p99, %p100
      %p102 = scmp.ne.s32.totalorder %s94, %s96
      %p103 = scmp.eq.s32.totalorder %s25, 1
      %p104 = por %p102, %p103
      %p105 = scmp.ne.s32.totalorder %s96, %s97
      %p106 = scmp.eq.s32.totalorder %s25, 0
      %p107 = por %p105, %p106
      %p108 = scmp.ne.s32.totalorder %s96, %s97
      %p109 = scmp.eq.s32.totalorder %s26, 1
      %p110 = por %p108, %p109
      %p112 = scmp.ne.s32.totalorder %s97, %s111
      %p113 = scmp.eq.s32.totalorder %s26, 0
      %p114 = por %p112, %p113
      %s116 = sadd.s32 %s115, 1
      %p119 = scmp.eq.s32.totalorder %s20, 1
      %p120 = scmp.ne.s32.totalorder %s115, %s117
      %p121 = scmp.eq.s32.totalorder %s20, 0
      %p122 = por %p120, %p121
      %p123 = scmp.ne.s32.totalorder %s115, %s117
      %p124 = scmp.eq.s32.totalorder %s25, 1
      %p125 = por %p123, %p124
      %p126 = scmp.ne.s32.totalorder %s117, %s118
      %p127 = scmp.eq.s32.totalorder %s25, 0
      %p128 = por %p126, %p127
      %p129 = scmp.ne.s32.totalorder %s117, %s118
      %p130 = scmp.eq.s32.totalorder %s26, 1
      %p131 = por %p129, %p130
      %p133 = scmp.ne.s32.totalorder %s118, %s132
      %p134 = scmp.eq.s32.totalorder %s26, 0
      %p135 = por %p133, %p134
      %s137 = sadd.s32 %s136, 1
      %p140 = scmp.eq.s32.totalorder %s20, 1
      %p141 = scmp.ne.s32.totalorder %s136, %s138
      %p142 = scmp.eq.s32.totalorder %s20, 0
      %p143 = por %p141, %p142
      %p144 = scmp.ne.s32.totalorder %s136, %s138
      %p145 = scmp.eq.s32.totalorder %s25, 1
      %p146 = por %p144, %p145
      %p147 = scmp.ne.s32.totalorder %s138, %s139
      %p148 = scmp.eq.s32.totalorder %s25, 0
      %p149 = por %p147, %p148
      %p150 = scmp.ne.s32.totalorder %s138, %s139
      %p151 = scmp.eq.s32.totalorder %s26, 1
      %p152 = por %p150, %p151
      %p154 = scmp.ne.s32.totalorder %s139, %s153
      %p155 = scmp.eq.s32.totalorder %s26, 0
      %p156 = por %p154, %p155
      %s157 = ssub.s32 %s27, %s39
      %s158 = ssub.s32 %s28, %s35
      %s159 = sor.u32 %s157, %s158
      %p160 = scmp.eq.s32.totalorder %s159, 0
      %s162 = sadd.s32 %s161, 1
      %s163 = scalar_select %p160, %s161, %s162
      %p166 = pneg %p160
      %p167 = scmp.eq.s32.totalorder %s20, 1
      %p168 = por %p166, %p167
      %p169 = scmp.ne.s32.totalorder %s161, %s164
      %p170 = scmp.eq.s32.totalorder %s20, 0
      %p171 = por %p169, %p170
      %p172 = scmp.ne.s32.totalorder %s161, %s164
      %p173 = scmp.eq.s32.totalorder %s25, 1
      %p174 = por %p172, %p173
      %p175 = scmp.ne.s32.totalorder %s164, %s165
      %p176 = scmp.eq.s32.totalorder %s25, 0
      %p177 = por %p175, %p176
      %p178 = scmp.ne.s32.totalorder %s164, %s165
      %p179 = scmp.eq.s32.totalorder %s26, 1
      %p180 = por %p178, %p179
      %p182 = scmp.ne.s32.totalorder %s165, %s181
      %p183 = scmp.eq.s32.totalorder %s26, 0
      %p184 = por %p182, %p183
      %p185 = scmp.le.s32.totalorder 1, %s20
      %p186 = scmp.lt.s32.totalorder %s20, 3
      %p187 = pnand %p185, %p186
      %p188 = pneg %p187
      // Predicated region
      $region9: #{tpu_custom_call.1} parent=5 // pred_check
        _
      $region10: #{tpu_custom_call.1} parent=5 // pred_check_branch
        %190 = sbr.rel (%p187) target = $region12
      $region11: #{tpu_custom_call.1} parent=5 // pred_region
        %s191 = ssub.s32 %s20, 1
        // Predicated region
        $region13: #{tpu_custom_call.1} parent=11 // pred_check
          %p192 = pneg %p107
        $region14: #{tpu_custom_call.1} parent=11 // pred_check_branch
          %194 = sbr.rel (%p192) target = $region16
        $region15: #{tpu_custom_call.1} parent=11 // pred_region
          _
        $region16: #{tpu_custom_call.1} parent=11 // pred_fallthru
          _
        // Predicated region
        $region17: #{tpu_custom_call.1} parent=11 // pred_check
          %p195 = pneg %p128
        $region18: #{tpu_custom_call.1} parent=11 // pred_check_branch
          %197 = sbr.rel (%p195) target = $region20
        $region19: #{tpu_custom_call.1} parent=11 // pred_region
          _
        $region20: #{tpu_custom_call.1} parent=11 // pred_fallthru
          _
        // Predicated region
        $region21: #{tpu_custom_call.1} parent=11 // pred_check
          %p198 = pneg %p149
        $region22: #{tpu_custom_call.1} parent=11 // pred_check_branch
          %200 = sbr.rel (%p198) target = $region24
        $region23: #{tpu_custom_call.1} parent=11 // pred_region
          _
        $region24: #{tpu_custom_call.1} parent=11 // pred_fallthru
          _
      $region12: #{tpu_custom_call.1} parent=5 // pred_fallthru
        _
      %p201 = scmp.lt.s32.totalorder %s20, 2
      // Predicated region
      $region25: #{tpu_custom_call.1} parent=5 // pred_check
        %p202 = pneg %p201
      $region26: #{tpu_custom_call.1} parent=5 // pred_check_branch
        %204 = sbr.rel (%p202) target = $region28
      $region27: #{tpu_custom_call.1} parent=5 // pred_region
        // Predicated region
        $region29: #{tpu_custom_call.1} parent=27 // pred_check
          %p205 = pneg %p54
        $region30: #{tpu_custom_call.1} parent=27 // pred_check_branch
          %207 = sbr.rel (%p205) target = $region32
        $region31: #{tpu_custom_call.1} parent=27 // pred_region
          %s208 = sand.u32 %s44, 1
          %s209 = scalar_lea.sflag [#allocation4], %s208
          %s210 = sand.u32 %s44, 1
          %s211 = smul.addr %s210, 8
          %s212 = scalar_lea.vmem [#allocation3], %s211
          %s213 = smul.u32 2, %s28
          %s215 = ssub.s32 128, 128
          %216 = vsyncadd %s209, %s215
          %s217 = smul.addr %s27, 2
          %s218 = sadd.s32 %s213, %s217
          %s219 = smul.addr %s218, 64
          %s220 = scalar_lea.hbm %s0, %s219
          %s222 = sshll.u32 %s212, 4
          %s223 = int_to_ptr.vmem [resolvable:$true] %s222
          %225 = dma.hbm_to_vmem [thread:$0]  %s220, 128, %s223, %s209
        $region32: #{tpu_custom_call.1} parent=27 // pred_fallthru
          _
        // Predicated region
        $region33: #{tpu_custom_call.1} parent=27 // pred_check
          %p226 = pneg %p80
        $region34: #{tpu_custom_call.1} parent=27 // pred_check_branch
          %228 = sbr.rel (%p226) target = $region36
        $region35: #{tpu_custom_call.1} parent=27 // pred_region
          %s229 = sand.u32 %s70, 1
          %s230 = scalar_lea.sflag [#allocation7], %s229
          %s231 = sand.u32 %s70, 1
          %s232 = smul.addr %s231, 8
          %s233 = scalar_lea.vmem [#allocation6], %s232
          %s235 = ssub.s32 128, 128
          %236 = vsyncadd %s230, %s235
          %s237 = smul.addr %s27, 128
          %s238 = scalar_lea.hbm %s1, %s237
          %s240 = sshll.u32 %s233, 4
          %s241 = int_to_ptr.vmem [resolvable:$true] %s240
          %243 = dma.hbm_to_vmem [thread:$0]  %s238, 128, %s241, %s230
        $region36: #{tpu_custom_call.1} parent=27 // pred_fallthru
          _
      $region28: #{tpu_custom_call.1} parent=5 // pred_fallthru
        _
      %p244 = scmp.le.s32.totalorder 1, %s20
      %p245 = scmp.lt.s32.totalorder %s20, 3
      %p246 = pnand %p244, %p245
      %p247 = pneg %p246
      // Predicated region
      $region37: #{tpu_custom_call.1} parent=5 // pred_check
        _
      $region38: #{tpu_custom_call.1} parent=5 // pred_check_branch
        %249 = sbr.rel (%p246) target = $region40
      $region39: #{tpu_custom_call.1} parent=5 // pred_region
        %s250 = ssub.s32 %s20, 1
        %s251 = sand.u32 %s47, 1
        %s252 = scalar_lea.sflag [#allocation4], %s251
        %s253 = sand.u32 %s47, 1
        %s254 = smul.addr %s253, 8
        %s255 = scalar_lea.vmem [#allocation3], %s254
        // Predicated region
        $region41: #{tpu_custom_call.1} parent=39 // pred_check
          %p256 = pneg %p60
        $region42: #{tpu_custom_call.1} parent=39 // pred_check_branch
          %258 = sbr.rel (%p256) target = $region44
        $region43: #{tpu_custom_call.1} parent=39 // pred_region
          %259 = dma.done %s252, 128
        $region44: #{tpu_custom_call.1} parent=39 // pred_fallthru
          _
        %s260 = sand.u32 %s73, 1
        %s261 = scalar_lea.sflag [#allocation7], %s260
        %s262 = sand.u32 %s73, 1
        %s263 = smul.addr %s262, 8
        %s264 = scalar_lea.vmem [#allocation6], %s263
        // Predicated region
        $region45: #{tpu_custom_call.1} parent=39 // pred_check
          %p265 = pneg %p86
        $region46: #{tpu_custom_call.1} parent=39 // pred_check_branch
          %267 = sbr.rel (%p265) target = $region48
        $region47: #{tpu_custom_call.1} parent=39 // pred_region
          %268 = dma.done %s261, 128
        $region48: #{tpu_custom_call.1} parent=39 // pred_fallthru
          _
        %s269 = sand.u32 %s47, 1
        %s270 = scalar_lea.sflag [#allocation4], %s269
        %s271 = sand.u32 %s47, 1
        %s272 = smul.addr %s271, 8
        %s273 = scalar_lea.vmem [#allocation3], %s272
        %p274 = pneg %p60
        %p275 = pneg %p57
        %s276 = sand.u32 %s73, 1
        %s277 = scalar_lea.sflag [#allocation7], %s276
        %s278 = sand.u32 %s73, 1
        %s279 = smul.addr %s278, 8
        %s280 = scalar_lea.vmem [#allocation6], %s279
        %p281 = pneg %p86
        %p282 = pneg %p83
        %p283 = pneg %p107
        %p284 = pneg %p104
        %p285 = pneg %p128
        %p286 = pneg %p125
        %p287 = pneg %p149
        %p288 = pneg %p146
        %p289 = pneg %p177
        %p290 = pneg %p174
        %s291 = sand.u32 %s164, 1
        %s292 = scalar_lea.sflag [#allocation5], %s291
        %s293 = sand.u32 %s164, 1
        %s294 = smul.addr %s293, 64
        %s295 = scalar_lea.vmem [#allocation8], %s294
        %s296 = smul.u32 2, %s30
        %s297 = smul.u32 2, %s30
        %v299 = vld [vmem:[%s3] sm:$0xf]
        %v300 = vld [vmem:[%s3 + $0x4] sm:$0xf]
        %v301 = vld [vmem:[%s3 + $0x8] sm:$0xf]
        %v302 = vld [vmem:[%s3 + $0xc] sm:$0xf]
        %v303 = vld [vmem:[%s4] sm:$0xff]
        %v304 = vld [vmem:[%s4 + $0x8] sm:$0xff]
        %v305 = vld [vmem:[%s4 + $0x10] sm:$0xff]
        %v306 = vld [vmem:[%s4 + $0x18] sm:$0xff]
        %v307 = vld [vmem:[%s255] sm:$0xff]
        %v309 = vcombine.high %v307, %v307
        %311 = vst [vmem:[#allocation2] sm:$0xf] %v307
        %312 = vst [vmem:[#allocation2 + $0x8] sm:$0xf] %v309
        %v313 = vld [vmem:[%s264] sm:$0xff]
        %v314 = vpack.c.bf16 %v313, %v313
        %v315 = vld [vmem:[%s2] sm:$0xff]
        %v316 = vld [vmem:[%s2 + $0x8] sm:$0xff]
        %v317 = vld [vmem:[%s2 + $0x10] sm:$0xff]
        %v318 = vld [vmem:[%s2 + $0x18] sm:$0xff]
        %v319 = vld [vmem:[%s2 + $0x20] sm:$0xff]
        %v320 = vld [vmem:[%s2 + $0x28] sm:$0xff]
        %v321 = vld [vmem:[%s2 + $0x30] sm:$0xff]
        %v322 = vld [vmem:[%s2 + $0x38] sm:$0xff]
        %v331 = vunpack.c.l.b16 %v315
        %v332 = vunpack.c.h.b16 %v315
        %v333 = vunpack.c.l.b16 %v316
        %v334 = vunpack.c.h.b16 %v316
        %v335 = vunpack.c.l.b16 %v317
        %v336 = vunpack.c.h.b16 %v317
        %v337 = vunpack.c.l.b16 %v318
        %v338 = vunpack.c.h.b16 %v318
        %v339 = vunpack.c.l.b16 %v319
        %v340 = vunpack.c.h.b16 %v319
        %v341 = vunpack.c.l.b16 %v320
        %v342 = vunpack.c.h.b16 %v320
        %v343 = vunpack.c.l.b16 %v321
        %v344 = vunpack.c.h.b16 %v321
        %v345 = vunpack.c.l.b16 %v322
        %v346 = vunpack.c.h.b16 %v322
        %v347 = vpack.c.b16 %v333, %v331
        %v348 = vpack.c.b16 %v334, %v332
        %v349 = vpack.c.b16 %v337, %v335
        %v350 = vpack.c.b16 %v338, %v336
        %v351 = vpack.c.b16 %v341, %v339
        %v352 = vpack.c.b16 %v342, %v340
        %v353 = vpack.c.b16 %v345, %v343
        %v354 = vpack.c.b16 %v346, %v344
        %vm363 = vcmask 523264
        %v365 = vsel %vm363, %v314, 0
        %367 = vmatprep.subr.bf16.mxu0 %v348
        %368 = vmatpush1.bf16.msra.mxu0 %v347
        %369 = vmatprep.subr.bf16.mxu0 %v350
        %370 = vmatpush1.bf16.msra.mxu0 %v349
        %371 = vmatprep.subr.bf16.mxu0 %v352
        %372 = vmatpush1.bf16.msra.mxu0 %v351
        %373 = vmatprep.subr.bf16.mxu0 %v354
        %374 = vmatpush1.bf16.msra.mxu0 %v353
        %375 = vmatprep.subr.bf16.mxu0 0
        %376 = vmatpush1.bf16.msra.mxu0 0
        %377 = vmatprep.subr.bf16.mxu0 0
        %378 = vmatpush1.bf16.msra.mxu0 0
        %379 = vmatprep.subr.bf16.mxu0 0
        %380 = vmatpush1.bf16.msra.mxu0 0
        %381 = vmatprep.subr.bf16.mxu0 0
        %382 = vmatpush1.bf16.msra.mxu0 0
        %383 = vmatprep.subr.bf16.mxu0 0
        %384 = vmatpush1.bf16.msra.mxu0 0
        %385 = vmatprep.subr.bf16.mxu0 0
        %386 = vmatpush1.bf16.msra.mxu0 0
        %387 = vmatprep.subr.bf16.mxu0 0
        %388 = vmatpush1.bf16.msra.mxu0 0
        %389 = vmatprep.subr.bf16.mxu0 0
        %390 = vmatpush1.bf16.msra.mxu0 0
        %391 = vmatprep.subr.bf16.mxu0 0
        %392 = vmatpush1.bf16.msra.mxu0 0
        %393 = vmatprep.subr.bf16.mxu0 0
        %394 = vmatpush1.bf16.msra.mxu0 0
        %395 = vmatprep.subr.bf16.mxu0 0
        %396 = vmatpush1.bf16.msra.mxu0 0
        %397 = vmatprep.subr.bf16.mxu0 0
        %398 = vmatpush1.bf16.msra.mxu0 0
        %399 = vmatprep.mubr.bf16.mxu0 0
        %400 = vmatmul.mubr.bf16.gmra.mrb[0].mxu0 %v365
        %v401 = vpop.f32.mrb[0].mxu0
        %v402 = vadd.f32 0.0, %v401
        %v403 = vpop.f32.mrb[0].mxu0
        %v404 = vadd.f32 0.0, %v403
        %v405 = vpop.f32.mrb[0].mxu0
        %v406 = vpop.f32.mrb[0].mxu0
        %407 = vdwg.mxu0
        %v410 = vrot.slane %v402, 4
        %v411 = vrot.slane %v404, 4
        %414 = vst [vmem:[#allocation2] sm:$0xf0] %v410
        %415 = vst [vmem:[#allocation2 + $0x8] sm:$0xf0] %v411
        %416 = vst [vmem:[#allocation2 + $0x10] sm:$0xf] %v410
        %417 = vst [vmem:[#allocation2 + $0x18] sm:$0xf] %v411
        %v418 = vld [vmem:[#allocation2] sm:$0xff]
        %v419 = vld [vmem:[#allocation2 + $0x8] sm:$0xff]
        %v420 = vld [vmem:[#allocation2 + $0x10] sm:$0xf]
        %v421 = vld [vmem:[#allocation2 + $0x18] sm:$0xf]
        %v422 = vpack.c.bf16 %v420, %v418
        %v423 = vpack.c.bf16 %v421, %v419
        %425 = vset.pattern.permute.xlu0 0
        %426 = vperm.xlu0 %425, %v303
        %v427 = vpop.permute.xlu0 %426
        %430 = vset.pattern.permute.xlu0 0
        %431 = vperm.xlu0 %430, %v304
        %v432 = vpop.permute.xlu0 %431
        %435 = vset.pattern.permute.xlu0 0
        %436 = vperm.xlu0 %435, %v305
        %v437 = vpop.permute.xlu0 %436
        %440 = vset.pattern.permute.xlu0 0
        %441 = vperm.xlu0 %440, %v306
        %v442 = vpop.permute.xlu0 %441
        %v448 = vunpack.c.l.b16 %v299
        %v449 = vunpack.c.l.b16 %v300
        %v450 = vunpack.c.l.b16 %v301
        %v451 = vunpack.c.l.b16 %v302
        %v452 = vpack.c.b16 %v449, %v448
        %v453 = vpack.c.b16 %v451, %v450
        %vm454 = vcmask 97280
        %v456 = vsel %vm454, %v452, 0
        %v459 = vsel %vm454, %v453, 0
        %vm461 = vcmask 1045504
        %v463 = vsel %vm461, %v422, 0
        %v466 = vsel %vm461, %v423, 0
        %468 = vmatprep.subr.bf16.mxu0 %v466
        %469 = vmatpush1.bf16.msra.mxu0 %v463
        %470 = vmatprep.subr.bf16.mxu0 0
        %471 = vmatpush1.bf16.msra.mxu0 0
        %472 = vmatprep.subr.bf16.mxu0 0
        %473 = vmatpush1.bf16.msra.mxu0 0
        %474 = vmatprep.subr.bf16.mxu0 0
        %475 = vmatpush1.bf16.msra.mxu0 0
        %476 = vmatprep.subr.bf16.mxu0 0
        %477 = vmatpush1.bf16.msra.mxu0 0
        %478 = vmatprep.subr.bf16.mxu0 0
        %479 = vmatpush1.bf16.msra.mxu0 0
        %480 = vmatprep.subr.bf16.mxu0 0
        %481 = vmatpush1.bf16.msra.mxu0 0
        %482 = vmatprep.subr.bf16.mxu0 0
        %483 = vmatpush1.bf16.msra.mxu0 0
        %484 = vmatprep.subr.bf16.mxu0 0
        %485 = vmatpush1.bf16.msra.mxu0 0
        %486 = vmatprep.subr.bf16.mxu0 0
        %487 = vmatpush1.bf16.msra.mxu0 0
        %488 = vmatprep.subr.bf16.mxu0 0
        %489 = vmatpush1.bf16.msra.mxu0 0
        %490 = vmatprep.subr.bf16.mxu0 0
        %491 = vmatpush1.bf16.msra.mxu0 0
        %492 = vmatprep.subr.bf16.mxu0 0
        %493 = vmatpush1.bf16.msra.mxu0 0
        %494 = vmatprep.subr.bf16.mxu0 0
        %495 = vmatpush1.bf16.msra.mxu0 0
        %496 = vmatprep.subr.bf16.mxu0 0
        %497 = vmatpush1.bf16.msra.mxu0 0
        %498 = vmatprep.subr.bf16.mxu0 0
        %499 = vmatpush1.bf16.msra.mxu0 0
        %500 = vmatprep.mubr.bf16.mxu0 0
        %501 = vmatmul.mubr.bf16.gmra.mrb[0].mxu0 %v456
        %v502 = vpop.f32.mrb[0].mxu0
        %v503 = vadd.f32 %v427, %v502
        %v504 = vpop.f32.mrb[0].mxu0
        %v505 = vadd.f32 %v427, %v504
        %v506 = vpop.f32.mrb[0].mxu0
        %v507 = vadd.f32 %v432, %v506
        %v508 = vpop.f32.mrb[0].mxu0
        %v509 = vadd.f32 %v432, %v508
        %510 = vmatprep.mubr.bf16.mxu0 0
        %511 = vmatmul.mubr.bf16.gmra.mrb[0].mxu0 %v459
        %v512 = vpop.f32.mrb[0].mxu0
        %v513 = vadd.f32 %v437, %v512
        %v514 = vpop.f32.mrb[0].mxu0
        %v515 = vadd.f32 %v437, %v514
        %v516 = vpop.f32.mrb[0].mxu0
        %v517 = vadd.f32 %v442, %v516
        %v518 = vpop.f32.mrb[0].mxu0
        %v519 = vadd.f32 %v442, %v518
        %520 = vdwg.mxu0
        %521 = vst [vmem:[%s295] sm:$0xff] %v503
        %522 = vst [vmem:[%s295 + $0x8] sm:$0xff] %v505
        %523 = vst [vmem:[%s295 + $0x10] sm:$0xff] %v507
        %524 = vst [vmem:[%s295 + $0x18] sm:$0xff] %v509
        %525 = vst [vmem:[%s295 + $0x20] sm:$0xff] %v513
        %526 = vst [vmem:[%s295 + $0x28] sm:$0xff] %v515
        %527 = vst [vmem:[%s295 + $0x30] sm:$0xff] %v517
        %528 = vst [vmem:[%s295 + $0x38] sm:$0xff] %v519
        %s529 = sand.u32 %s164, 1
        %s530 = scalar_lea.sflag [#allocation5], %s529
        %s531 = sand.u32 %s164, 1
        %s532 = smul.addr %s531, 64
        %s533 = scalar_lea.vmem [#allocation8], %s532
        // Predicated region
        $region49: #{tpu_custom_call.1} parent=39 // pred_check
          %p534 = pneg %p174
        $region50: #{tpu_custom_call.1} parent=39 // pred_check_branch
          %536 = sbr.rel (%p534) target = $region52
        $region51: #{tpu_custom_call.1} parent=39 // pred_region
          %s537 = smul.u32 2, %s30
          %s539 = ssub.s32 1024, 1024
          %540 = vsyncadd %s530, %s539
          %s541 = smul.addr %s29, 8
          %s542 = sadd.s32 %s537, %s541
          %s543 = smul.addr %s542, 128
          %s544 = scalar_lea.hbm %s5, %s543
          %s545 = sshll.u32 %s533, 4
          %s546 = int_to_ptr.vmem [resolvable:$true] %s545
          %551 = dma.vmem_to_hbm [thread:$0]  %s546, 1024, %s544, %s530, 256, 256, 16
        $region52: #{tpu_custom_call.1} parent=39 // pred_fallthru
          _
      $region40: #{tpu_custom_call.1} parent=5 // pred_fallthru
        _
      %p552 = scmp.le.s32.totalorder 2, %s20
      // Predicated region
      $region53: #{tpu_custom_call.1} parent=5 // pred_check
        %p553 = pneg %p552
      $region54: #{tpu_custom_call.1} parent=5 // pred_check_branch
        %555 = sbr.rel (%p553) target = $region56
      $region55: #{tpu_custom_call.1} parent=5 // pred_region
        %s556 = ssub.s32 %s20, 2
        // Predicated region
        $region57: #{tpu_custom_call.1} parent=55 // pred_check
          %p557 = pneg %p180
        $region58: #{tpu_custom_call.1} parent=55 // pred_check_branch
          %559 = sbr.rel (%p557) target = $region60
        $region59: #{tpu_custom_call.1} parent=55 // pred_region
          %s560 = sand.u32 %s165, 1
          %s561 = scalar_lea.sflag [#allocation5], %s560
          %s562 = sand.u32 %s165, 1
          %s563 = smul.addr %s562, 64
          %s564 = scalar_lea.vmem [#allocation8], %s563
          %565 = dma.done %s561, 1024
        $region60: #{tpu_custom_call.1} parent=55 // pred_fallthru
          _
      $region56: #{tpu_custom_call.1} parent=5 // pred_fallthru
        _
    $region6: #{tpu_custom_call.1} parent=1 // loop_footer
      %s24 = sadd.s32 1, %s20
    $region7: #{tpu_custom_call.1} parent=1 // loop_footer_branch
      %19 = sbr.rel target = $region3
    $region8: #{tpu_custom_call.1} parent=1 // loop_exit
      _
    %566 = vsyncpa [#allocation4], 1
    %s567 = scalar_lea.sflag [#allocation4], 1
    %568 = vsyncpa %s567, 1
    %569 = vsyncpa [#allocation7], 1
    %s570 = scalar_lea.sflag [#allocation7], 1
    %571 = vsyncpa %s570, 1
    %572 = vsyncpa [#allocation5], 1
    %s573 = scalar_lea.sflag [#allocation5], 1
    %574 = vsyncpa %s573, 1

// kernel: tpu_custom_call.1
$region0: #{tpu_custom_call.1}
  #allocation0 [shape = 'u32[]', space=smem, size = 0x4, offset = 0x4, fixed_abs, tag = 'smem constant byte address 0x4 - core index']
  #allocation1 [shape = 'u32[144,128]{1,0:T(1,128)}', space=vmem, size = 0x12000, scoped, tag = 'internal scratch']
  #allocation2 [shape = 'f32[12,256]{1,0:T(8,128)}', space=vmem, size = 0x4000, scoped, tag = 'scratch operand']
  %s0 = inlined_call_operand.hbm [shape: f32[2,4,256], index: 0, kind: input, shape index: {}]
  %s1 = inlined_call_operand.hbm [shape: f32[2,8,64], index: 1, kind: input, shape index: {}]
  %s2 = inlined_call_operand.vmem [shape: bf16[64,256], index: 2, kind: input, shape index: {}]
  %s3 = inlined_call_operand.vmem [shape: bf16[32,12], index: 3, kind: input, shape index: {}]
  %s4 = inlined_call_operand.vmem [shape: f32[32,1], index: 4, kind: input, shape index: {}]
  %s5 = inlined_call_operand.hbm [shape: f32[2,32,256], index: 5, kind: output, shape index: {}]
  %s6 = sld [smem:[#allocation0]]
  $region61: #{tpu_custom_call.1} parent=0
    _
  %s8 = ssub.s32 1, %s6
  %s9 = scalar_select 0, %s8, %s6
  $region1: #{tpu_custom_call.1} parent=0
    #allocation3 [shape = 'u8[8192]{0}', space=vmem, size = 0x2000, scoped, tag = 'input window, operand 0']
    #allocation4 [shape = 's32[2]{0}', space=sflag, size = 0x8, scoped, tag = 'scoped memory for tpu_custom_call.1']
    #allocation5 [shape = 's32[2]{0}', space=sflag, size = 0x8, scoped, tag = 'scoped memory for tpu_custom_call.1']
    #allocation6 [shape = 'u8[8192]{0}', space=vmem, size = 0x2000, scoped, tag = 'input window, operand 1']
    #allocation7 [shape = 's32[2]{0}', space=sflag, size = 0x8, scoped, tag = 'scoped memory for tpu_custom_call.1']
    #allocation8 [shape = 'u8[65536]{0}', space=vmem, size = 0x10000, scoped, tag = 'output window, operand 0']
    %10 = vsyncpa [#allocation4], 0
    %s11 = scalar_lea.sflag [#allocation4], 1
    %12 = vsyncpa %s11, 0
    %13 = vsyncpa [#allocation7], 0
    %s14 = scalar_lea.sflag [#allocation7], 1
    %15 = vsyncpa %s14, 0
    %16 = vsyncpa [#allocation5], 0
    %s17 = scalar_lea.sflag [#allocation5], 1
    %18 = vsyncpa %s17, 0
    loop: start=0, step=1, limit=4
    $region2: #{tpu_custom_call.1} parent=1 // loop_pre_header
      _
    $region3: #{tpu_custom_call.1} parent=1 // loop_header
      %s20 = sphi 0, %s24
      %p21 = scmp.ge.s32.totalorder %s20, 4
      %s27 = sphi 0, %s39
      %s28 = sphi 0, %s35
      %s29 = sphi 0, %s27
      %s30 = sphi 0, %s28
      %s31 = sphi 0, %s29
      %s32 = sphi 0, %s30
      %s44 = sphi 0, %s46
      %s47 = sphi 0, %s44
      %s48 = sphi 0, %s47
      %s64 = sphi 0, %s48
      %s70 = sphi 0, %s72
      %s73 = sphi 0, %s70
      %s74 = sphi 0, %s73
      %s90 = sphi 0, %s74
      %s94 = sphi 0, %s94
      %s96 = sphi 0, %s94
      %s97 = sphi 0, %s96
      %s111 = sphi 0, %s97
      %s115 = sphi 0, %s115
      %s117 = sphi 0, %s115
      %s118 = sphi 0, %s117
      %s132 = sphi 0, %s118
      %s136 = sphi 0, %s136
      %s138 = sphi 0, %s136
      %s139 = sphi 0, %s138
      %s153 = sphi 0, %s139
      %s161 = sphi 0, %s163
      %s164 = sphi 0, %s161
      %s165 = sphi 0, %s164
      %s181 = sphi 0, %s165
    $region4: #{tpu_custom_call.1} parent=1 // loop_header_branch
      %23 = sbr.rel (%p21) target = $region8
    $region5: #{tpu_custom_call.1} parent=1 // loop_body
      %s25 = ssub.s32 %s20, 1
      %s26 = ssub.s32 %s20, 2
      %s33 = sadd.s32 1, %s28
      %p34 = scmp.ge.s32.totalorder %s33, 1
      %s35 = scalar_select %p34, 0, %s33
      %s36 = sadd.s32 1, %s27
      %s37 = scalar_select %p34, %s36, %s27
      %p38 = scmp.ge.s32.totalorder %s37, 2
      %s39 = scalar_select %p38, 0, %s37
      %s40 = ssub.s32 %s27, %s39
      %s41 = ssub.s32 %s28, %s35
      %s42 = sor.u32 %s40, %s41
      %p43 = scmp.eq.s32.totalorder %s42, 0
      %s45 = sadd.s32 %s44, 1
      %s46 = scalar_select %p43, %s44, %s45
      %p49 = pneg %p43
      %p50 = scmp.eq.s32.totalorder %s20, 1
      %p51 = por %p49, %p50
      %p52 = scmp.ne.s32.totalorder %s44, %s47
      %p53 = scmp.eq.s32.totalorder %s20, 0
      %p54 = por %p52, %p53
      %p55 = scmp.ne.s32.totalorder %s44, %s47
      %p56 = scmp.eq.s32.totalorder %s25, 1
      %p57 = por %p55, %p56
      %p58 = scmp.ne.s32.totalorder %s47, %s48
      %p59 = scmp.eq.s32.totalorder %s25, 0
      %p60 = por %p58, %p59
      %p61 = scmp.ne.s32.totalorder %s47, %s48
      %p62 = scmp.eq.s32.totalorder %s26, 1
      %p63 = por %p61, %p62
      %p65 = scmp.ne.s32.totalorder %s48, %s64
      %p66 = scmp.eq.s32.totalorder %s26, 0
      %p67 = por %p65, %p66
      %s68 = ssub.s32 %s27, %s39
      %p69 = scmp.eq.s32.totalorder %s68, 0
      %s71 = sadd.s32 %s70, 1
      %s72 = scalar_select %p69, %s70, %s71
      %p75 = pneg %p69
      %p76 = scmp.eq.s32.totalorder %s20, 1
      %p77 = por %p75, %p76
      %p78 = scmp.ne.s32.totalorder %s70, %s73
      %p79 = scmp.eq.s32.totalorder %s20, 0
      %p80 = por %p78, %p79
      %p81 = scmp.ne.s32.totalorder %s70, %s73
      %p82 = scmp.eq.s32.totalorder %s25, 1
      %p83 = por %p81, %p82
      %p84 = scmp.ne.s32.totalorder %s73, %s74
      %p85 = scmp.eq.s32.totalorder %s25, 0
      %p86 = por %p84, %p85
      %p87 = scmp.ne.s32.totalorder %s73, %s74
      %p88 = scmp.eq.s32.totalorder %s26, 1
      %p89 = por %p87, %p88
      %p91 = scmp.ne.s32.totalorder %s74, %s90
      %p92 = scmp.eq.s32.totalorder %s26, 0
      %p93 = por %p91, %p92
      %s95 = sadd.s32 %s94, 1
      %p98 = scmp.eq.s32.totalorder %s20, 1
      %p99 = scmp.ne.s32.totalorder %s94, %s96
      %p100 = scmp.eq.s32.totalorder %s20, 0
      %p101 = por %p99, %p100
      %p102 = scmp.ne.s32.totalorder %s94, %s96
      %p103 = scmp.eq.s32.totalorder %s25, 1
      %p104 = por %p102, %p103
      %p105 = scmp.ne.s32.totalorder %s96, %s97
      %p106 = scmp.eq.s32.totalorder %s25, 0
      %p107 = por %p105, %p106
      %p108 = scmp.ne.s32.totalorder %s96, %s97
      %p109 = scmp.eq.s32.totalorder %s26, 1
      %p110 = por %p108, %p109
      %p112 = scmp.ne.s32.totalorder %s97, %s111
      %p113 = scmp.eq.s32.totalorder %s26, 0
      %p114 = por %p112, %p113
      %s116 = sadd.s32 %s115, 1
      %p119 = scmp.eq.s32.totalorder %s20, 1
      %p120 = scmp.ne.s32.totalorder %s115, %s117
      %p121 = scmp.eq.s32.totalorder %s20, 0
      %p122 = por %p120, %p121
      %p123 = scmp.ne.s32.totalorder %s115, %s117
      %p124 = scmp.eq.s32.totalorder %s25, 1
      %p125 = por %p123, %p124
      %p126 = scmp.ne.s32.totalorder %s117, %s118
      %p127 = scmp.eq.s32.totalorder %s25, 0
      %p128 = por %p126, %p127
      %p129 = scmp.ne.s32.totalorder %s117, %s118
      %p130 = scmp.eq.s32.totalorder %s26, 1
      %p131 = por %p129, %p130
      %p133 = scmp.ne.s32.totalorder %s118, %s132
      %p134 = scmp.eq.s32.totalorder %s26, 0
      %p135 = por %p133, %p134
      %s137 = sadd.s32 %s136, 1
      %p140 = scmp.eq.s32.totalorder %s20, 1
      %p141 = scmp.ne.s32.totalorder %s136, %s138
      %p142 = scmp.eq.s32.totalorder %s20, 0
      %p143 = por %p141, %p142
      %p144 = scmp.ne.s32.totalorder %s136, %s138
      %p145 = scmp.eq.s32.totalorder %s25, 1
      %p146 = por %p144, %p145
      %p147 = scmp.ne.s32.totalorder %s138, %s139
      %p148 = scmp.eq.s32.totalorder %s25, 0
      %p149 = por %p147, %p148
      %p150 = scmp.ne.s32.totalorder %s138, %s139
      %p151 = scmp.eq.s32.totalorder %s26, 1
      %p152 = por %p150, %p151
      %p154 = scmp.ne.s32.totalorder %s139, %s153
      %p155 = scmp.eq.s32.totalorder %s26, 0
      %p156 = por %p154, %p155
      %s157 = ssub.s32 %s27, %s39
      %s158 = ssub.s32 %s28, %s35
      %s159 = sor.u32 %s157, %s158
      %p160 = scmp.eq.s32.totalorder %s159, 0
      %s162 = sadd.s32 %s161, 1
      %s163 = scalar_select %p160, %s161, %s162
      %p166 = pneg %p160
      %p167 = scmp.eq.s32.totalorder %s20, 1
      %p168 = por %p166, %p167
      %p169 = scmp.ne.s32.totalorder %s161, %s164
      %p170 = scmp.eq.s32.totalorder %s20, 0
      %p171 = por %p169, %p170
      %p172 = scmp.ne.s32.totalorder %s161, %s164
      %p173 = scmp.eq.s32.totalorder %s25, 1
      %p174 = por %p172, %p173
      %p175 = scmp.ne.s32.totalorder %s164, %s165
      %p176 = scmp.eq.s32.totalorder %s25, 0
      %p177 = por %p175, %p176
      %p178 = scmp.ne.s32.totalorder %s164, %s165
      %p179 = scmp.eq.s32.totalorder %s26, 1
      %p180 = por %p178, %p179
      %p182 = scmp.ne.s32.totalorder %s165, %s181
      %p183 = scmp.eq.s32.totalorder %s26, 0
      %p184 = por %p182, %p183
      %p185 = scmp.le.s32.totalorder 1, %s20
      %p186 = scmp.lt.s32.totalorder %s20, 3
      %p187 = pnand %p185, %p186
      %p188 = pneg %p187
      // Predicated region
      $region9: #{tpu_custom_call.1} parent=5 // pred_check
        _
      $region10: #{tpu_custom_call.1} parent=5 // pred_check_branch
        %190 = sbr.rel (%p187) target = $region12
      $region11: #{tpu_custom_call.1} parent=5 // pred_region
        %s191 = ssub.s32 %s20, 1
        // Predicated region
        $region13: #{tpu_custom_call.1} parent=11 // pred_check
          %p192 = pneg %p107
        $region14: #{tpu_custom_call.1} parent=11 // pred_check_branch
          %194 = sbr.rel (%p192) target = $region16
        $region15: #{tpu_custom_call.1} parent=11 // pred_region
          _
        $region16: #{tpu_custom_call.1} parent=11 // pred_fallthru
          _
        // Predicated region
        $region17: #{tpu_custom_call.1} parent=11 // pred_check
          %p195 = pneg %p128
        $region18: #{tpu_custom_call.1} parent=11 // pred_check_branch
          %197 = sbr.rel (%p195) target = $region20
        $region19: #{tpu_custom_call.1} parent=11 // pred_region
          _
        $region20: #{tpu_custom_call.1} parent=11 // pred_fallthru
          _
        // Predicated region
        $region21: #{tpu_custom_call.1} parent=11 // pred_check
          %p198 = pneg %p149
        $region22: #{tpu_custom_call.1} parent=11 // pred_check_branch
          %200 = sbr.rel (%p198) target = $region24
        $region23: #{tpu_custom_call.1} parent=11 // pred_region
          _
        $region24: #{tpu_custom_call.1} parent=11 // pred_fallthru
          _
      $region12: #{tpu_custom_call.1} parent=5 // pred_fallthru
        _
      %p201 = scmp.lt.s32.totalorder %s20, 2
      // Predicated region
      $region25: #{tpu_custom_call.1} parent=5 // pred_check
        %p202 = pneg %p201
      $region26: #{tpu_custom_call.1} parent=5 // pred_check_branch
        %204 = sbr.rel (%p202) target = $region28
      $region27: #{tpu_custom_call.1} parent=5 // pred_region
        // Predicated region
        $region29: #{tpu_custom_call.1} parent=27 // pred_check
          %p205 = pneg %p54
        $region30: #{tpu_custom_call.1} parent=27 // pred_check_branch
          %207 = sbr.rel (%p205) target = $region32
        $region31: #{tpu_custom_call.1} parent=27 // pred_region
          %s208 = sand.u32 %s44, 1
          %s209 = scalar_lea.sflag [#allocation4], %s208
          %s210 = sand.u32 %s44, 1
          %s211 = smul.addr %s210, 8
          %s212 = scalar_lea.vmem [#allocation3], %s211
          %s213 = smul.u32 2, %s28
          %s215 = ssub.s32 128, 128
          %216 = vsyncadd %s209, %s215
          %s217 = smul.addr %s27, 2
          %s218 = sadd.s32 %s213, %s217
          %s219 = smul.addr %s218, 64
          %s220 = scalar_lea.hbm %s0, %s219
          %s222 = sshll.u32 %s212, 4
          %s223 = int_to_ptr.vmem [resolvable:$true] %s222
          %225 = dma.hbm_to_vmem [thread:$0]  %s220, 128, %s223, %s209
        $region32: #{tpu_custom_call.1} parent=27 // pred_fallthru
          _
        // Predicated region
        $region33: #{tpu_custom_call.1} parent=27 // pred_check
          %p226 = pneg %p80
        $region34: #{tpu_custom_call.1} parent=27 // pred_check_branch
          %228 = sbr.rel (%p226) target = $region36
        $region35: #{tpu_custom_call.1} parent=27 // pred_region
          %s229 = sand.u32 %s70, 1
          %s230 = scalar_lea.sflag [#allocation7], %s229
          %s231 = sand.u32 %s70, 1
          %s232 = smul.addr %s231, 8
          %s233 = scalar_lea.vmem [#allocation6], %s232
          %s235 = ssub.s32 128, 128
          %236 = vsyncadd %s230, %s235
          %s237 = smul.addr %s27, 128
          %s238 = scalar_lea.hbm %s1, %s237
          %s240 = sshll.u32 %s233, 4
          %s241 = int_to_ptr.vmem [resolvable:$true] %s240
          %243 = dma.hbm_to_vmem [thread:$0]  %s238, 128, %s241, %s230
        $region36: #{tpu_custom_call.1} parent=27 // pred_fallthru
          _
      $region28: #{tpu_custom_call.1} parent=5 // pred_fallthru
        _
      %p244 = scmp.le.s32.totalorder 1, %s20
      %p245 = scmp.lt.s32.totalorder %s20, 3
      %p246 = pnand %p244, %p245
      %p247 = pneg %p246
      // Predicated region
      $region37: #{tpu_custom_call.1} parent=5 // pred_check
        _
      $region38: #{tpu_custom_call.1} parent=5 // pred_check_branch
        %249 = sbr.rel (%p246) target = $region40
      $region39: #{tpu_custom_call.1} parent=5 // pred_region
        %s250 = ssub.s32 %s20, 1
        %s251 = sand.u32 %s47, 1
        %s252 = scalar_lea.sflag [#allocation4], %s251
        %s253 = sand.u32 %s47, 1
        %s254 = smul.addr %s253, 8
        %s255 = scalar_lea.vmem [#allocation3], %s254
        // Predicated region
        $region41: #{tpu_custom_call.1} parent=39 // pred_check
          %p256 = pneg %p60
        $region42: #{tpu_custom_call.1} parent=39 // pred_check_branch
          %258 = sbr.rel (%p256) target = $region44
        $region43: #{tpu_custom_call.1} parent=39 // pred_region
          %259 = dma.done %s252, 128
        $region44: #{tpu_custom_call.1} parent=39 // pred_fallthru
          _
        %s260 = sand.u32 %s73, 1
        %s261 = scalar_lea.sflag [#allocation7], %s260
        %s262 = sand.u32 %s73, 1
        %s263 = smul.addr %s262, 8
        %s264 = scalar_lea.vmem [#allocation6], %s263
        // Predicated region
        $region45: #{tpu_custom_call.1} parent=39 // pred_check
          %p265 = pneg %p86
        $region46: #{tpu_custom_call.1} parent=39 // pred_check_branch
          %267 = sbr.rel (%p265) target = $region48
        $region47: #{tpu_custom_call.1} parent=39 // pred_region
          %268 = dma.done %s261, 128
        $region48: #{tpu_custom_call.1} parent=39 // pred_fallthru
          _
        %s269 = sand.u32 %s47, 1
        %s270 = scalar_lea.sflag [#allocation4], %s269
        %s271 = sand.u32 %s47, 1
        %s272 = smul.addr %s271, 8
        %s273 = scalar_lea.vmem [#allocation3], %s272
        %p274 = pneg %p60
        %p275 = pneg %p57
        %s276 = sand.u32 %s73, 1
        %s277 = scalar_lea.sflag [#allocation7], %s276
        %s278 = sand.u32 %s73, 1
        %s279 = smul.addr %s278, 8
        %s280 = scalar_lea.vmem [#allocation6], %s279
        %p281 = pneg %p86
        %p282 = pneg %p83
        %p283 = pneg %p107
        %p284 = pneg %p104
        %p285 = pneg %p128
        %p286 = pneg %p125
        %p287 = pneg %p149
        %p288 = pneg %p146
        %p289 = pneg %p177
        %p290 = pneg %p174
        %s291 = sand.u32 %s164, 1
        %s292 = scalar_lea.sflag [#allocation5], %s291
        %s293 = sand.u32 %s164, 1
        %s294 = smul.addr %s293, 64
        %s295 = scalar_lea.vmem [#allocation8], %s294
        %s296 = smul.u32 2, %s30
        %s297 = smul.u32 2, %s30
        %v299 = vld [vmem:[%s3] sm:$0xf]
        %v300 = vld [vmem:[%s3 + $0x4] sm:$0xf]
        %v301 = vld [vmem:[%s3 + $0x8] sm:$0xf]
        %v302 = vld [vmem:[%s3 + $0xc] sm:$0xf]
        %v303 = vld [vmem:[%s4] sm:$0xff]
        %v304 = vld [vmem:[%s4 + $0x8] sm:$0xff]
        %v305 = vld [vmem:[%s4 + $0x10] sm:$0xff]
        %v306 = vld [vmem:[%s4 + $0x18] sm:$0xff]
        %v307 = vld [vmem:[%s255] sm:$0xff]
        %v309 = vcombine.high %v307, %v307
        %311 = vst [vmem:[#allocation2] sm:$0xf] %v307
        %312 = vst [vmem:[#allocation2 + $0x8] sm:$0xf] %v309
        %v313 = vld [vmem:[%s264] sm:$0xff]
        %v314 = vpack.c.bf16 %v313, %v313
        %v315 = vld [vmem:[%s2] sm:$0xff]
        %v316 = vld [vmem:[%s2 + $0x8] sm:$0xff]
        %v317 = vld [vmem:[%s2 + $0x10] sm:$0xff]
        %v318 = vld [vmem:[%s2 + $0x18] sm:$0xff]
        %v319 = vld [vmem:[%s2 + $0x20] sm:$0xff]
        %v320 = vld [vmem:[%s2 + $0x28] sm:$0xff]
        %v321 = vld [vmem:[%s2 + $0x30] sm:$0xff]
        %v322 = vld [vmem:[%s2 + $0x38] sm:$0xff]
        %v331 = vunpack.c.l.b16 %v315
        %v332 = vunpack.c.h.b16 %v315
        %v333 = vunpack.c.l.b16 %v316
        %v334 = vunpack.c.h.b16 %v316
        %v335 = vunpack.c.l.b16 %v317
        %v336 = vunpack.c.h.b16 %v317
        %v337 = vunpack.c.l.b16 %v318
        %v338 = vunpack.c.h.b16 %v318
        %v339 = vunpack.c.l.b16 %v319
        %v340 = vunpack.c.h.b16 %v319
        %v341 = vunpack.c.l.b16 %v320
        %v342 = vunpack.c.h.b16 %v320
        %v343 = vunpack.c.l.b16 %v321
        %v344 = vunpack.c.h.b16 %v321
        %v345 = vunpack.c.l.b16 %v322
        %v346 = vunpack.c.h.b16 %v322
        %v347 = vpack.c.b16 %v333, %v331
        %v348 = vpack.c.b16 %v334, %v332
        %v349 = vpack.c.b16 %v337, %v335
        %v350 = vpack.c.b16 %v338, %v336
        %v351 = vpack.c.b16 %v341, %v339
        %v352 = vpack.c.b16 %v342, %v340
        %v353 = vpack.c.b16 %v345, %v343
        %v354 = vpack.c.b16 %v346, %v344
        %vm363 = vcmask 523264
        %v365 = vsel %vm363, %v314, 0
        %367 = vmatprep.subr.bf16.mxu0 %v348
        %368 = vmatpush1.bf16.msra.mxu0 %v347
        %369 = vmatprep.subr.bf16.mxu0 %v350
        %370 = vmatpush1.bf16.msra.mxu0 %v349
        %371 = vmatprep.subr.bf16.mxu0 %v352
        %372 = vmatpush1.bf16.msra.mxu0 %v351
        %373 = vmatprep.subr.bf16.mxu0 %v354
        %374 = vmatpush1.bf16.msra.mxu0 %v353
        %375 = vmatprep.subr.bf16.mxu0 0
        %376 = vmatpush1.bf16.msra.mxu0 0
        %377 = vmatprep.subr.bf16.mxu0 0
        %378 = vmatpush1.bf16.msra.mxu0 0
        %379 = vmatprep.subr.bf16.mxu0 0
        %380 = vmatpush1.bf16.msra.mxu0 0
        %381 = vmatprep.subr.bf16.mxu0 0
        %382 = vmatpush1.bf16.msra.mxu0 0
        %383 = vmatprep.subr.bf16.mxu0 0
        %384 = vmatpush1.bf16.msra.mxu0 0
        %385 = vmatprep.subr.bf16.mxu0 0
        %386 = vmatpush1.bf16.msra.mxu0 0
        %387 = vmatprep.subr.bf16.mxu0 0
        %388 = vmatpush1.bf16.msra.mxu0 0
        %389 = vmatprep.subr.bf16.mxu0 0
        %390 = vmatpush1.bf16.msra.mxu0 0
        %391 = vmatprep.subr.bf16.mxu0 0
        %392 = vmatpush1.bf16.msra.mxu0 0
        %393 = vmatprep.subr.bf16.mxu0 0
        %394 = vmatpush1.bf16.msra.mxu0 0
        %395 = vmatprep.subr.bf16.mxu0 0
        %396 = vmatpush1.bf16.msra.mxu0 0
        %397 = vmatprep.subr.bf16.mxu0 0
        %398 = vmatpush1.bf16.msra.mxu0 0
        %399 = vmatprep.mubr.bf16.mxu0 0
        %400 = vmatmul.mubr.bf16.gmra.mrb[0].mxu0 %v365
        %v401 = vpop.f32.mrb[0].mxu0
        %v402 = vadd.f32 0.0, %v401
        %v403 = vpop.f32.mrb[0].mxu0
        %v404 = vadd.f32 0.0, %v403
        %v405 = vpop.f32.mrb[0].mxu0
        %v406 = vpop.f32.mrb[0].mxu0
        %407 = vdwg.mxu0
        %v410 = vrot.slane %v402, 4
        %v411 = vrot.slane %v404, 4
        %414 = vst [vmem:[#allocation2] sm:$0xf0] %v410
        %415 = vst [vmem:[#allocation2 + $0x8] sm:$0xf0] %v411
        %416 = vst [vmem:[#allocation2 + $0x10] sm:$0xf] %v410
        %417 = vst [vmem:[#allocation2 + $0x18] sm:$0xf] %v411
        %v418 = vld [vmem:[#allocation2] sm:$0xff]
        %v419 = vld [vmem:[#allocation2 + $0x8] sm:$0xff]
        %v420 = vld [vmem:[#allocation2 + $0x10] sm:$0xf]
        %v421 = vld [vmem:[#allocation2 + $0x18] sm:$0xf]
        %v422 = vpack.c.bf16 %v420, %v418
        %v423 = vpack.c.bf16 %v421, %v419
        %425 = vset.pattern.permute.xlu0 0
        %426 = vperm.xlu0 %425, %v303
        %v427 = vpop.permute.xlu0 %426
        %430 = vset.pattern.permute.xlu0 0
        %431 = vperm.xlu0 %430, %v304
        %v432 = vpop.permute.xlu0 %431
        %435 = vset.pattern.permute.xlu0 0
        %436 = vperm.xlu0 %435, %v305
        %v437 = vpop.permute.xlu0 %436
        %440 = vset.pattern.permute.xlu0 0
        %441 = vperm.xlu0 %440, %v306
        %v442 = vpop.permute.xlu0 %441
        %v448 = vunpack.c.l.b16 %v299
        %v449 = vunpack.c.l.b16 %v300
        %v450 = vunpack.c.l.b16 %v301
        %v451 = vunpack.c.l.b16 %v302
        %v452 = vpack.c.b16 %v449, %v448
        %v453 = vpack.c.b16 %v451, %v450
        %vm454 = vcmask 97280
        %v456 = vsel %vm454, %v452, 0
        %v459 = vsel %vm454, %v453, 0
        %vm461 = vcmask 1045504
        %v463 = vsel %vm461, %v422, 0
        %v466 = vsel %vm461, %v423, 0
        %468 = vmatprep.subr.bf16.mxu0 %v466
        %469 = vmatpush1.bf16.msra.mxu0 %v463
        %470 = vmatprep.subr.bf16.mxu0 0
        %471 = vmatpush1.bf16.msra.mxu0 0
        %472 = vmatprep.subr.bf16.mxu0 0
        %473 = vmatpush1.bf16.msra.mxu0 0
        %474 = vmatprep.subr.bf16.mxu0 0
        %475 = vmatpush1.bf16.msra.mxu0 0
        %476 = vmatprep.subr.bf16.mxu0 0
        %477 = vmatpush1.bf16.msra.mxu0 0
        %478 = vmatprep.subr.bf16.mxu0 0
        %479 = vmatpush1.bf16.msra.mxu0 0
        %480 = vmatprep.subr.bf16.mxu0 0
        %481 = vmatpush1.bf16.msra.mxu0 0
        %482 = vmatprep.subr.bf16.mxu0 0
        %483 = vmatpush1.bf16.msra.mxu0 0
        %484 = vmatprep.subr.bf16.mxu0 0
        %485 = vmatpush1.bf16.msra.mxu0 0
        %486 = vmatprep.subr.bf16.mxu0 0
        %487 = vmatpush1.bf16.msra.mxu0 0
        %488 = vmatprep.subr.bf16.mxu0 0
        %489 = vmatpush1.bf16.msra.mxu0 0
        %490 = vmatprep.subr.bf16.mxu0 0
        %491 = vmatpush1.bf16.msra.mxu0 0
        %492 = vmatprep.subr.bf16.mxu0 0
        %493 = vmatpush1.bf16.msra.mxu0 0
        %494 = vmatprep.subr.bf16.mxu0 0
        %495 = vmatpush1.bf16.msra.mxu0 0
        %496 = vmatprep.subr.bf16.mxu0 0
        %497 = vmatpush1.bf16.msra.mxu0 0
        %498 = vmatprep.subr.bf16.mxu0 0
        %499 = vmatpush1.bf16.msra.mxu0 0
        %500 = vmatprep.mubr.bf16.mxu0 0
        %501 = vmatmul.mubr.bf16.gmra.mrb[0].mxu0 %v456
        %v502 = vpop.f32.mrb[0].mxu0
        %v503 = vadd.f32 %v427, %v502
        %v504 = vpop.f32.mrb[0].mxu0
        %v505 = vadd.f32 %v427, %v504
        %v506 = vpop.f32.mrb[0].mxu0
        %v507 = vadd.f32 %v432, %v506
        %v508 = vpop.f32.mrb[0].mxu0
        %v509 = vadd.f32 %v432, %v508
        %510 = vmatprep.mubr.bf16.mxu0 0
        %511 = vmatmul.mubr.bf16.gmra.mrb[0].mxu0 %v459
        %v512 = vpop.f32.mrb[0].mxu0
        %v513 = vadd.f32 %v437, %v512
        %v514 = vpop.f32.mrb[0].mxu0
        %v515 = vadd.f32 %v437, %v514
        %v516 = vpop.f32.mrb[0].mxu0
        %v517 = vadd.f32 %v442, %v516
        %v518 = vpop.f32.mrb[0].mxu0
        %v519 = vadd.f32 %v442, %v518
        %520 = vdwg.mxu0
        %521 = vst [vmem:[%s295] sm:$0xff] %v503
        %522 = vst [vmem:[%s295 + $0x8] sm:$0xff] %v505
        %523 = vst [vmem:[%s295 + $0x10] sm:$0xff] %v507
        %524 = vst [vmem:[%s295 + $0x18] sm:$0xff] %v509
        %525 = vst [vmem:[%s295 + $0x20] sm:$0xff] %v513
        %526 = vst [vmem:[%s295 + $0x28] sm:$0xff] %v515
        %527 = vst [vmem:[%s295 + $0x30] sm:$0xff] %v517
        %528 = vst [vmem:[%s295 + $0x38] sm:$0xff] %v519
        %s529 = sand.u32 %s164, 1
        %s530 = scalar_lea.sflag [#allocation5], %s529
        %s531 = sand.u32 %s164, 1
        %s532 = smul.addr %s531, 64
        %s533 = scalar_lea.vmem [#allocation8], %s532
        // Predicated region
        $region49: #{tpu_custom_call.1} parent=39 // pred_check
          %p534 = pneg %p174
        $region50: #{tpu_custom_call.1} parent=39 // pred_check_branch
          %536 = sbr.rel (%p534) target = $region52
        $region51: #{tpu_custom_call.1} parent=39 // pred_region
          %s537 = smul.u32 2, %s30
          %s539 = ssub.s32 1024, 1024
          %540 = vsyncadd %s530, %s539
          %s541 = smul.addr %s29, 8
          %s542 = sadd.s32 %s537, %s541
          %s543 = smul.addr %s542, 128
          %s544 = scalar_lea.hbm %s5, %s543
          %s545 = sshll.u32 %s533, 4
          %s546 = int_to_ptr.vmem [resolvable:$true] %s545
          %551 = dma.vmem_to_hbm [thread:$0]  %s546, 1024, %s544, %s530, 256, 256, 16
        $region52: #{tpu_custom_call.1} parent=39 // pred_fallthru
          _
      $region40: #{tpu_custom_call.1} parent=5 // pred_fallthru
        _
      %p552 = scmp.le.s32.totalorder 2, %s20
      // Predicated region
      $region53: #{tpu_custom_call.1} parent=5 // pred_check
        %p553 = pneg %p552
      $region54: #{tpu_custom_call.1} parent=5 // pred_check_branch
        %555 = sbr.rel (%p553) target = $region56
      $region55: #{tpu_custom_call.1} parent=5 // pred_region
        %s556 = ssub.s32 %s20, 2
        // Predicated region
        $region57: #{tpu_custom_call.1} parent=55 // pred_check
          %p557 = pneg %p180
        $region58: #{tpu_custom_call.1} parent=55 // pred_check_branch
          %559 = sbr.rel (%p557) target = $region60
        $region59: #{tpu_custom_call.1} parent=55 // pred_region
          %s560 = sand.u32 %s165, 1
          %s561 = scalar_lea.sflag [#allocation5], %s560
          %s562 = sand.u32 %s165, 1
          %s563 = smul.addr %s562, 64
          %s564 = scalar_lea.vmem [#allocation8], %s563
          %565 = dma.done %s561, 1024
        $region60: #{tpu_custom_call.1} parent=55 // pred_fallthru
          _
      $region56: #{tpu_custom_call.1} parent=5 // pred_fallthru
        _
    $region6: #{tpu_custom_call.1} parent=1 // loop_footer
      %s24 = sadd.s32 1, %s20
    $region7: #{tpu_custom_call.1} parent=1 // loop_footer_branch
      %19 = sbr.rel target = $region3
    $region8: #{tpu_custom_call.1} parent=1 // loop_exit
      _
    %566 = vsyncpa [#allocation4], 1
    %s567 = scalar_lea.sflag [#allocation4], 1
    %568 = vsyncpa %s567, 1
    %569 = vsyncpa [#allocation7], 1
    %s570 = scalar_lea.sflag [#allocation7], 1
    %571 = vsyncpa %s570, 1
    %572 = vsyncpa [#allocation5], 1
    %s573 = scalar_lea.sflag [#allocation5], 1
    %574 = vsyncpa %s573, 1

</llo_original>
